<compile_context>
chip_gen: v6e
topology: v6e:2x2x1
jax: 0.10.0
libtpu: 0.0.40
codegen_flags: <defaults>
</compile_context>

<pallas_src>
import jax
import jax.numpy as jnp
from jax.experimental import pallas as pl
from jax.experimental.pallas import tpu as pltpu

# ---------------------------------------------------------------------------
# Problem sizes
# ---------------------------------------------------------------------------
C, H, W = 4, 16, 16                # channels, spatial (PyTorch NCHW input)
D = C * H * W                      # flattened feature dim = 1024
NUM_CLASSES = 10                   # closed-set classes
P = 128                            # lane-padded logit width (NC + 2 <= 128)
TILE_B = 128                       # batch rows per grid step (one full MXU pass)
N_TOTAL = 256                      # total eval batch in the demo (2 grid steps)

# Packing sanity (masked logsumexp needs >= 1 real column per head).
assert 1 <= NUM_CLASSES and NUM_CLASSES + 2 <= P


def openmodel_kernel(x_ref, w_ref, b_ref, thr_ref, cls_ref):
    # x_ref:   (TILE_B, D) bf16 VMEM     w_ref: (D, P) bf16 VMEM (resident)
    # b_ref:   (1, P)      f32  VMEM     thr_ref: (1, 1) f32 SMEM
    # cls_ref: (8, TILE_B) i32  VMEM     (8 identical sublane rows, lane-dense)
    x = x_ref[...]
    w = w_ref[...]

    # Fused matmul for both heads: bf16 operands, f32 accumulate on the MXU.
    z = jnp.dot(x, w, preferred_element_type=jnp.float32) + b_ref[...]  # (TILE_B, P)

    # Transpose once so the batch lives on the lane axis: every following
    # reduction is a sublane reduction and the output store is lane-dense.
    zt = jnp.transpose(z)                                               # (P, TILE_B)

    row = jax.lax.broadcasted_iota(jnp.int32, zt.shape, 0)              # class index
    neg_big = jnp.float32(-1e30)

    # ---- closed-set head: logsumexp + argmax over rows [0, NUM_CLASSES) ----
    z_cls = jnp.where(row < NUM_CLASSES, zt, neg_big)
    m_cls = jnp.max(z_cls, axis=0, keepdims=True)                       # (1, TILE_B)
    lse_cls = m_cls + jnp.log(
        jnp.sum(jnp.exp(z_cls - m_cls), axis=0, keepdims=True))         # (1, TILE_B)

    # First-max argmax (torch.max(dim=1)[1] tie-breaking): masked rows are
    # exactly -1e30 < m_cls, so no extra mask is needed in the compare.
    idx = jnp.where(z_cls >= m_cls, row, jnp.int32(P))
    classes = jnp.min(idx, axis=0, keepdims=True)                       # (1, TILE_B)

    # ---- OOD head: log softmax(logit_ood)[:, 1] from the two rows directly --
    z0 = zt[NUM_CLASSES:NUM_CLASSES + 1, :]                             # (1, TILE_B)
    z1 = zt[NUM_CLASSES + 1:NUM_CLASSES + 2, :]                         # (1, TILE_B)
    d = z0 - z1
    # log_p2 = log sigmoid(z1 - z0) = -(max(d,0) + log(1 + exp(-|d|)))  (stable)
    log_p2 = -(jnp.maximum(d, 0.0) + jnp.log(1.0 + jnp.exp(-jnp.abs(d))))

    # ---- confidence + threshold override ------------------------------------
    conf = -lse_cls + log_p2                                            # (1, TILE_B)
    thr = thr_ref[0, 0]
    result = jnp.where(conf > thr, jnp.int32(NUM_CLASSES), classes).astype(jnp.int32)

    # Lane-dense, (8,128)-aligned unmasked store (8 replicated sublane rows).
    cls_ref[...] = jnp.broadcast_to(result, (8, TILE_B))


def openmodel_forward(img, w_packed, b_packed, threshold):
    """img: (N, C, H, W) f32  ->  classes: (N,) int32."""
    n = img.shape[0]
    x = img.reshape(n, D).astype(jnp.bfloat16)          # bf16 activations in HBM
    w = w_packed.astype(jnp.bfloat16)                   # bf16 weights in HBM
    b = b_packed.reshape(1, P).astype(jnp.float32)
    thr = jnp.reshape(threshold.astype(jnp.float32), (1, 1))

    n_pad = pl.cdiv(n, TILE_B) * TILE_B
    if n_pad != n:
        x = jnp.pad(x, ((0, n_pad - n), (0, 0)))
    num_tiles = n_pad // TILE_B

    cost = pl.CostEstimate(
        flops=2 * n_pad * D * P,
        transcendentals=n_pad * P,
        bytes_accessed=x.size * 2 + w.size * 2 + b.size * 4 + 8 * n_pad * 4,
    )

    out = pl.pallas_call(
        openmodel_kernel,
        out_shape=jax.ShapeDtypeStruct((8, n_pad), jnp.int32),
        grid=(num_tiles,),
        in_specs=[
            pl.BlockSpec((TILE_B, D), lambda i: (i, 0)),   # pipelined x tiles
            pl.BlockSpec((D, P), lambda i: (0, 0)),        # weight: VMEM-resident
            pl.BlockSpec((1, P), lambda i: (0, 0)),        # bias:   VMEM-resident
            pl.BlockSpec(memory_space=pltpu.MemorySpace.SMEM),
        ],
        out_specs=pl.BlockSpec((8, TILE_B), lambda i: (0, i)),
        compiler_params=pltpu.CompilerParams(
            dimension_semantics=("parallel",)),            # v7x: 2 TCs share the batch
        cost_estimate=cost,
    )(x, w, b, thr)
    return out[0, :n]


def _reference(img, w_packed, b_packed, threshold):
    """Pure-JAX reference reproducing the PyTorch forward() (bf16-rounded inputs
    to match the kernel's matmul operands)."""
    n = img.shape[0]
    x = img.reshape(n, D).astype(jnp.bfloat16).astype(jnp.float32)
    w = w_packed.astype(jnp.bfloat16).astype(jnp.float32)
    z = x @ w + b_packed.reshape(1, P).astype(jnp.float32)
    logit = z[:, :NUM_CLASSES]
    logit_ood = z[:, NUM_CLASSES:NUM_CLASSES + 2]
    p1 = jax.scipy.special.logsumexp(logit, axis=1)
    log_p2 = logit_ood[:, 1] - jax.scipy.special.logsumexp(logit_ood, axis=1)
    conf = -p1 + log_p2
    arg = jnp.argmax(logit, axis=1).astype(jnp.int32)
    classes = jnp.where(conf > threshold, NUM_CLASSES, arg).astype(jnp.int32)
    return classes, conf, arg


if __name__ == "__main__":
    key = jax.random.PRNGKey(0)
    k_img, k_wc, k_wo, k_bc, k_bo = jax.random.split(key, 5)

    img = jax.random.normal(k_img, (N_TOTAL, C, H, W), dtype=jnp.float32)

    # Deterministic synthetic parameters (no checkpoint load).
    w_cls = jax.random.normal(k_wc, (D, NUM_CLASSES), jnp.float32) * 0.02
    w_ood = jax.random.normal(k_wo, (D, 2), jnp.float32) * 0.02
    b_cls = jax.random.normal(k_bc, (NUM_CLASSES,), jnp.float32) * 0.1
    b_ood = jax.random.normal(k_bo, (2,), jnp.float32) * 0.1

    # Pack both heads into lane-padded [D, P] / [1, P] buffers.
    w_packed = jnp.zeros((D, P), jnp.float32)
    w_packed = w_packed.at[:, :NUM_CLASSES].set(w_cls)
    w_packed = w_packed.at[:, NUM_CLASSES:NUM_CLASSES + 2].set(w_ood)
    b_packed = jnp.zeros((1, P), jnp.float32)
    b_packed = b_packed.at[0, :NUM_CLASSES].set(b_cls)
    b_packed = b_packed.at[0, NUM_CLASSES:NUM_CLASSES + 2].set(b_ood)

    threshold = jnp.float32(-3.0)

    classes = openmodel_forward(img, w_packed, b_packed, threshold)
    jax.block_until_ready(classes)

    ref_cls, ref_conf, ref_arg = _reference(img, w_packed, b_packed, threshold)

    # Exact match required everywhere except rows whose confidence sits
    # numerically on the threshold boundary (accumulation-order noise may flip
    # the strict '>' compare there); such rows must still yield a valid answer.
    exact_ok = classes == ref_cls
    on_boundary = jnp.abs(ref_conf - threshold) <= 1e-3
    boundary_ok = on_boundary & ((classes == ref_arg) | (classes == NUM_CLASSES))
    assert bool(jnp.all(exact_ok | boundary_ok)), (classes, ref_cls)

    print("KERNEL_OK")
</pallas_src>

<mosaic_0001>
module attributes {stable_mosaic.version = 11 : i64} {
  func.func @openmodel_kernel(%arg0: i32, %arg1: memref<128x1024xbf16, #tpu.memory_space<vmem>>, %arg2: memref<1024x128xbf16, #tpu.memory_space<vmem>>, %arg3: memref<1x128xf32, #tpu.memory_space<vmem>>, %arg4: memref<1x1xf32, #tpu.memory_space<smem>>, %arg5: memref<8x128xi32, #tpu.memory_space<vmem>>) attributes {dimension_semantics = [#tpu.dimension_semantics<parallel>], iteration_bounds = array<i64: 2>, scalar_prefetch = 0 : i64, scratch_operands = 0 : i64, tpu.core_type = #tpu.core_type<tc>, window_params = [{transform_indices = @transform_0, window_bounds = array<i64: 128, 1024>}, {pipeline_mode = #tpu.pipeline_mode<synchronous>, transform_indices = @transform_1, window_bounds = array<i64: 1024, 128>}, {pipeline_mode = #tpu.pipeline_mode<synchronous>, transform_indices = @transform_2, window_bounds = array<i64: 1, 128>}, {transform_indices = @transform_3, window_bounds = array<i64: 1, 1>}, {transform_indices = @transform_4, window_bounds = array<i64: 8, 128>}]} {
    %c0 = arith.constant 0 : index
    %c0_0 = arith.constant 0 : index
    %0 = vector.load %arg1[%c0, %c0_0] : memref<128x1024xbf16, #tpu.memory_space<vmem>>, vector<128x1024xbf16>
    %c0_1 = arith.constant 0 : index
    %c0_2 = arith.constant 0 : index
    %1 = vector.load %arg2[%c0_1, %c0_2] : memref<1024x128xbf16, #tpu.memory_space<vmem>>, vector<1024x128xbf16>
    %cst = arith.constant dense<0.000000e+00> : vector<128x128xf32>
    %2 = tpu.matmul %0, %1, %cst {dimension_numbers = #tpu.dot_dimension_numbers<[1], [0], [0], [1], [0, 0, 1, 1], [], []>} : vector<128x1024xbf16>, vector<1024x128xbf16>, vector<128x128xf32> -> vector<128x128xf32>
    %c0_3 = arith.constant 0 : index
    %c0_4 = arith.constant 0 : index
    %3 = vector.load %arg3[%c0_3, %c0_4] : memref<1x128xf32, #tpu.memory_space<vmem>>, vector<1x128xf32>
    %4 = vector.broadcast %3 : vector<1x128xf32> to vector<128x128xf32>
    %5 = arith.addf %2, %4 : vector<128x128xf32>
    %6 = tpu.transpose %5, [1, 0] : vector<128x128xf32> -> vector<128x128xf32>
    %7 = tpu.iota {dimensions = array<i32: 0>} : vector<128x128xi32>
    %c10_i32 = arith.constant 10 : i32
    %8 = vector.broadcast %c10_i32 : i32 to vector<128x128xi32>
    %9 = arith.cmpi slt, %7, %8 : vector<128x128xi32>
    %cst_5 = arith.constant -1.000000e+30 : f32
    %10 = vector.broadcast %cst_5 : f32 to vector<128x128xf32>
    %11 = arith.select %9, %6, %10 : vector<128x128xi1>, vector<128x128xf32>
    %cst_6 = arith.constant dense<0xFF800000> : vector<128xf32>
    %12 = vector.multi_reduction <maximumf>, %11, %cst_6 [0] : vector<128x128xf32> to vector<128xf32>
    %13 = vector.shape_cast %12 : vector<128xf32> to vector<1x128xf32>
    %14 = vector.broadcast %13 : vector<1x128xf32> to vector<128x128xf32>
    %15 = arith.subf %11, %14 : vector<128x128xf32>
    %16 = math.exp %15 : vector<128x128xf32>
    %cst_7 = arith.constant dense<0.000000e+00> : vector<128xf32>
    %17 = vector.multi_reduction <add>, %16, %cst_7 [0] : vector<128x128xf32> to vector<128xf32>
    %18 = vector.shape_cast %17 : vector<128xf32> to vector<1x128xf32>
    %19 = math.log %18 : vector<1x128xf32>
    %20 = arith.addf %13, %19 : vector<1x128xf32>
    %21 = vector.broadcast %13 : vector<1x128xf32> to vector<128x128xf32>
    %22 = arith.cmpf oge, %11, %21 : vector<128x128xf32>
    %c128_i32 = arith.constant 128 : i32
    %23 = vector.broadcast %c128_i32 : i32 to vector<128x128xi32>
    %24 = arith.select %22, %7, %23 : vector<128x128xi1>, vector<128x128xi32>
    %cst_8 = arith.constant dense<2147483647> : vector<128xi32>
    %25 = vector.multi_reduction <minsi>, %24, %cst_8 [0] : vector<128x128xi32> to vector<128xi32>
    %26 = vector.shape_cast %25 : vector<128xi32> to vector<1x128xi32>
    %27 = vector.extract_strided_slice %6 {offsets = [10, 0], sizes = [1, 128], strides = [1, 1]} : vector<128x128xf32> to vector<1x128xf32>
    %28 = vector.extract_strided_slice %6 {offsets = [11, 0], sizes = [1, 128], strides = [1, 1]} : vector<128x128xf32> to vector<1x128xf32>
    %29 = arith.subf %27, %28 : vector<1x128xf32>
    %cst_9 = arith.constant 0.000000e+00 : f32
    %30 = vector.broadcast %cst_9 : f32 to vector<1x128xf32>
    %31 = arith.maximumf %29, %30 : vector<1x128xf32>
    %32 = math.absf %29 : vector<1x128xf32>
    %cst_10 = arith.constant 0.000000e+00 : f32
    %33 = vector.broadcast %cst_10 : f32 to vector<1x128xf32>
    %34 = arith.subf %33, %32 : vector<1x128xf32>
    %35 = math.exp %34 : vector<1x128xf32>
    %cst_11 = arith.constant 1.000000e+00 : f32
    %36 = vector.broadcast %cst_11 : f32 to vector<1x128xf32>
    %37 = arith.addf %36, %35 : vector<1x128xf32>
    %38 = math.log %37 : vector<1x128xf32>
    %39 = arith.addf %31, %38 : vector<1x128xf32>
    %cst_12 = arith.constant 0.000000e+00 : f32
    %40 = vector.broadcast %cst_12 : f32 to vector<1x128xf32>
    %41 = arith.subf %40, %39 : vector<1x128xf32>
    %cst_13 = arith.constant 0.000000e+00 : f32
    %42 = vector.broadcast %cst_13 : f32 to vector<1x128xf32>
    %43 = arith.subf %42, %20 : vector<1x128xf32>
    %44 = arith.addf %43, %41 : vector<1x128xf32>
    %c0_14 = arith.constant 0 : index
    %c0_15 = arith.constant 0 : index
    %45 = memref.load %arg4[%c0_14, %c0_15] : memref<1x1xf32, #tpu.memory_space<smem>>
    %46 = vector.broadcast %45 : f32 to vector<1x128xf32>
    %47 = arith.cmpf ogt, %44, %46 : vector<1x128xf32>
    %c10_i32_16 = arith.constant 10 : i32
    %48 = vector.broadcast %c10_i32_16 : i32 to vector<1x128xi32>
    %49 = arith.select %47, %48, %26 : vector<1x128xi1>, vector<1x128xi32>
    %50 = vector.shape_cast %49 : vector<1x128xi32> to vector<1x128xi32>
    %51 = vector.broadcast %50 : vector<1x128xi32> to vector<8x128xi32>
    %c0_17 = arith.constant 0 : index
    %c0_18 = arith.constant 0 : index
    %52 = vector.load %arg5[%c0_17, %c0_18] : memref<8x128xi32, #tpu.memory_space<vmem>>, vector<8x128xi32>
    tpu.vector_store %arg5[%c0_17, %c0_18], %51 {strides = array<i32>} : memref<8x128xi32, #tpu.memory_space<vmem>>, vector<8x128xi32>,
    return
  }
  func.func @transform_0(%arg0: i32) -> (i32, i32) {
    %c0_i32 = arith.constant 0 : i32
    %c0_i32_0 = arith.constant 0 : i32
    return %arg0, %c0_i32 : i32, i32
  }
  func.func @transform_1(%arg0: i32) -> (i32, i32) {
    %c0_i32 = arith.constant 0 : i32
    %c0_i32_0 = arith.constant 0 : i32
    %c0_i32_1 = arith.constant 0 : i32
    return %c0_i32, %c0_i32_0 : i32, i32
  }
  func.func @transform_2(%arg0: i32) -> (i32, i32) {
    %c0_i32 = arith.constant 0 : i32
    %c0_i32_0 = arith.constant 0 : i32
    %c0_i32_1 = arith.constant 0 : i32
    return %c0_i32, %c0_i32_0 : i32, i32
  }
  func.func @transform_3(%arg0: i32) -> (i32, i32) {
    %c0_i32 = arith.constant 0 : i32
    %c0_i32_0 = arith.constant 0 : i32
    %c0_i32_1 = arith.constant 0 : i32
    return %c0_i32, %c0_i32_0 : i32, i32
  }
  func.func @transform_4(%arg0: i32) -> (i32, i32) {
    %c0_i32 = arith.constant 0 : i32
    %c0_i32_0 = arith.constant 0 : i32
    return %c0_i32, %arg0 : i32, i32
  }
}

</mosaic_0001>

<llo_original>
// kernel: tpu_custom_call.1
$region0: #{tpu_custom_call.1}
  #allocation0 [shape = 'u32[]', space=smem, size = 0x4, offset = 0x4, fixed_abs, tag = 'smem constant byte address 0x4 - core index']
  #allocation1 [shape = 'u32[144,128]{1,0:T(1,128)}', space=vmem, size = 0x12000, scoped, tag = 'internal scratch']
  #allocation2 [shape = 'f32[1,1]{1,0:T(1,128)S(6)}', space=smem, size = 0x200, scoped, tag = 'scoped memory for tpu_custom_call.1']
  %s0 = inlined_call_operand.hbm [shape: bf16[256,1024], index: 0, kind: input, shape index: {}]
  %s1 = inlined_call_operand.hbm [shape: bf16[1024,128], index: 1, kind: input, shape index: {}]
  %s2 = inlined_call_operand.vmem [shape: f32[1,128], index: 2, kind: input, shape index: {}]
  %s3 = inlined_call_operand.<no memory space> [shape: f32[1,1], index: 3, kind: input, shape index: {}]
  %s4 = inlined_call_operand.hbm [shape: s32[8,256], index: 4, kind: output, shape index: {}]
  %s5 = sld [smem:[#allocation0]]
  $region57: #{tpu_custom_call.1} parent=0
    _
  %s7 = ssub.s32 1, %s5
  %s8 = scalar_select 0, %s7, %s5
  %9 = sst [smem:[#allocation2]] %s3
  $region1: #{tpu_custom_call.1} parent=0
    #allocation3 [shape = 'u8[524288]{0}', space=vmem, size = 0x80000, scoped, tag = 'input window, operand 0']
    #allocation4 [shape = 's32[2]{0}', space=sflag, size = 0x8, scoped, tag = 'scoped memory for tpu_custom_call.1']
    #allocation5 [shape = 's32[2]{0}', space=sflag, size = 0x8, scoped, tag = 'scoped memory for tpu_custom_call.1']
    #allocation6 [shape = 'u8[262144]{0}', space=vmem, size = 0x40000, scoped, tag = 'input window, operand 1, single buffered']
    #allocation7 [shape = 's32[1]{0}', space=sflag, size = 0x4, scoped, tag = 'scoped memory for tpu_custom_call.1']
    #allocation8 [shape = 'u8[8192]{0}', space=vmem, size = 0x2000, scoped, tag = 'output window, operand 0']
    %10 = vsyncpa [#allocation4], 0
    %s11 = scalar_lea.sflag [#allocation4], 1
    %12 = vsyncpa %s11, 0
    %13 = vsyncpa [#allocation7], 0
    %14 = vsyncpa [#allocation5], 0
    %s15 = scalar_lea.sflag [#allocation5], 1
    %16 = vsyncpa %s15, 0
    loop: start=0, step=1, limit=4
    $region2: #{tpu_custom_call.1} parent=1 // loop_pre_header
      _
    $region3: #{tpu_custom_call.1} parent=1 // loop_header
      %s18 = sphi 0, %s22
      %p19 = scmp.ge.s32.totalorder %s18, 4
      %s28 = sphi 0, %s30
      %s31 = sphi 0, %s28
      %s32 = sphi 0, %s31
      %s48 = sphi 0, %s32
      %s52 = sphi 0, %s52
      %s54 = sphi 0, %s52
      %s55 = sphi 0, %s54
      %s69 = sphi 0, %s55
      %s73 = sphi 0, %s73
      %s75 = sphi 0, %s73
      %s76 = sphi 0, %s75
      %s90 = sphi 0, %s76
      %s94 = sphi 0, %s94
      %s96 = sphi 0, %s94
      %s97 = sphi 0, %s96
      %s111 = sphi 0, %s97
      %s117 = sphi 0, %s119
      %s120 = sphi 0, %s117
      %s121 = sphi 0, %s120
      %s137 = sphi 0, %s121
    $region4: #{tpu_custom_call.1} parent=1 // loop_header_branch
      %21 = sbr.rel (%p19) target = $region8
    $region5: #{tpu_custom_call.1} parent=1 // loop_body
      %s23 = ssub.s32 %s18, 1
      %s24 = ssub.s32 %s18, 2
      %s25 = sadd.s32 %s18, 1
      %s26 = ssub.s32 %s18, %s25
      %p27 = scmp.eq.s32.totalorder %s26, 0
      %s29 = sadd.s32 %s28, 1
      %s30 = scalar_select %p27, %s28, %s29
      %p33 = pneg %p27
      %p34 = scmp.eq.s32.totalorder %s18, 1
      %p35 = por %p33, %p34
      %p36 = scmp.ne.s32.totalorder %s28, %s31
      %p37 = scmp.eq.s32.totalorder %s18, 0
      %p38 = por %p36, %p37
      %p39 = scmp.ne.s32.totalorder %s28, %s31
      %p40 = scmp.eq.s32.totalorder %s23, 1
      %p41 = por %p39, %p40
      %p42 = scmp.ne.s32.totalorder %s31, %s32
      %p43 = scmp.eq.s32.totalorder %s23, 0
      %p44 = por %p42, %p43
      %p45 = scmp.ne.s32.totalorder %s31, %s32
      %p46 = scmp.eq.s32.totalorder %s24, 1
      %p47 = por %p45, %p46
      %p49 = scmp.ne.s32.totalorder %s32, %s48
      %p50 = scmp.eq.s32.totalorder %s24, 0
      %p51 = por %p49, %p50
      %s53 = sadd.s32 %s52, 1
      %p56 = scmp.eq.s32.totalorder %s18, 1
      %p57 = scmp.ne.s32.totalorder %s52, %s54
      %p58 = scmp.eq.s32.totalorder %s18, 0
      %p59 = por %p57, %p58
      %p60 = scmp.ne.s32.totalorder %s52, %s54
      %p61 = scmp.eq.s32.totalorder %s23, 1
      %p62 = por %p60, %p61
      %p63 = scmp.ne.s32.totalorder %s54, %s55
      %p64 = scmp.eq.s32.totalorder %s23, 0
      %p65 = por %p63, %p64
      %p66 = scmp.ne.s32.totalorder %s54, %s55
      %p67 = scmp.eq.s32.totalorder %s24, 1
      %p68 = por %p66, %p67
      %p70 = scmp.ne.s32.totalorder %s55, %s69
      %p71 = scmp.eq.s32.totalorder %s24, 0
      %p72 = por %p70, %p71
      %s74 = sadd.s32 %s73, 1
      %p77 = scmp.eq.s32.totalorder %s18, 1
      %p78 = scmp.ne.s32.totalorder %s73, %s75
      %p79 = scmp.eq.s32.totalorder %s18, 0
      %p80 = por %p78, %p79
      %p81 = scmp.ne.s32.totalorder %s73, %s75
      %p82 = scmp.eq.s32.totalorder %s23, 1
      %p83 = por %p81, %p82
      %p84 = scmp.ne.s32.totalorder %s75, %s76
      %p85 = scmp.eq.s32.totalorder %s23, 0
      %p86 = por %p84, %p85
      %p87 = scmp.ne.s32.totalorder %s75, %s76
      %p88 = scmp.eq.s32.totalorder %s24, 1
      %p89 = por %p87, %p88
      %p91 = scmp.ne.s32.totalorder %s76, %s90
      %p92 = scmp.eq.s32.totalorder %s24, 0
      %p93 = por %p91, %p92
      %s95 = sadd.s32 %s94, 1
      %p98 = scmp.eq.s32.totalorder %s18, 1
      %p99 = scmp.ne.s32.totalorder %s94, %s96
      %p100 = scmp.eq.s32.totalorder %s18, 0
      %p101 = por %p99, %p100
      %p102 = scmp.ne.s32.totalorder %s94, %s96
      %p103 = scmp.eq.s32.totalorder %s23, 1
      %p104 = por %p102, %p103
      %p105 = scmp.ne.s32.totalorder %s96, %s97
      %p106 = scmp.eq.s32.totalorder %s23, 0
      %p107 = por %p105, %p106
      %p108 = scmp.ne.s32.totalorder %s96, %s97
      %p109 = scmp.eq.s32.totalorder %s24, 1
      %p110 = por %p108, %p109
      %p112 = scmp.ne.s32.totalorder %s97, %s111
      %p113 = scmp.eq.s32.totalorder %s24, 0
      %p114 = por %p112, %p113
      %s115 = ssub.s32 %s18, %s25
      %p116 = scmp.eq.s32.totalorder %s115, 0
      %s118 = sadd.s32 %s117, 1
      %s119 = scalar_select %p116, %s117, %s118
      %p122 = pneg %p116
      %p123 = scmp.eq.s32.totalorder %s18, 1
      %p124 = por %p122, %p123
      %p125 = scmp.ne.s32.totalorder %s117, %s120
      %p126 = scmp.eq.s32.totalorder %s18, 0
      %p127 = por %p125, %p126
      %p128 = scmp.ne.s32.totalorder %s117, %s120
      %p129 = scmp.eq.s32.totalorder %s23, 1
      %p130 = por %p128, %p129
      %p131 = scmp.ne.s32.totalorder %s120, %s121
      %p132 = scmp.eq.s32.totalorder %s23, 0
      %p133 = por %p131, %p132
      %p134 = scmp.ne.s32.totalorder %s120, %s121
      %p135 = scmp.eq.s32.totalorder %s24, 1
      %p136 = por %p134, %p135
      %p138 = scmp.ne.s32.totalorder %s121, %s137
      %p139 = scmp.eq.s32.totalorder %s24, 0
      %p140 = por %p138, %p139
      %p141 = scmp.le.s32.totalorder 1, %s18
      %p142 = scmp.lt.s32.totalorder %s18, 3
      %p143 = pnand %p141, %p142
      %p144 = pneg %p143
      // Predicated region
      $region9: #{tpu_custom_call.1} parent=5 // pred_check
        _
      $region10: #{tpu_custom_call.1} parent=5 // pred_check_branch
        %146 = sbr.rel (%p143) target = $region12
      $region11: #{tpu_custom_call.1} parent=5 // pred_region
        %s147 = ssub.s32 %s18, 1
        // Predicated region
        $region13: #{tpu_custom_call.1} parent=11 // pred_check
          %p148 = pneg %p65
        $region14: #{tpu_custom_call.1} parent=11 // pred_check_branch
          %150 = sbr.rel (%p148) target = $region16
        $region15: #{tpu_custom_call.1} parent=11 // pred_region
          %s152 = ssub.s32 8192, 8192
          %153 = vsyncadd [#allocation7], %s152
          %s154 = sshll.u32 [#allocation6], 4
          %s155 = int_to_ptr.vmem [resolvable:$true] %s154
          %160 = dma.hbm_to_vmem [thread:$0]  %s1, 8192, %s155, [#allocation7], 64, 64, 4
        $region16: #{tpu_custom_call.1} parent=11 // pred_fallthru
          _
        // Predicated region
        $region17: #{tpu_custom_call.1} parent=11 // pred_check
          %p161 = pneg %p86
        $region18: #{tpu_custom_call.1} parent=11 // pred_check_branch
          %163 = sbr.rel (%p161) target = $region20
        $region19: #{tpu_custom_call.1} parent=11 // pred_region
          _
        $region20: #{tpu_custom_call.1} parent=11 // pred_fallthru
          _
        // Predicated region
        $region21: #{tpu_custom_call.1} parent=11 // pred_check
          %p164 = pneg %p107
        $region22: #{tpu_custom_call.1} parent=11 // pred_check_branch
          %166 = sbr.rel (%p164) target = $region24
        $region23: #{tpu_custom_call.1} parent=11 // pred_region
          _
        $region24: #{tpu_custom_call.1} parent=11 // pred_fallthru
          _
      $region12: #{tpu_custom_call.1} parent=5 // pred_fallthru
        _
      %p167 = scmp.lt.s32.totalorder %s18, 2
      // Predicated region
      $region25: #{tpu_custom_call.1} parent=5 // pred_check
        %p168 = pneg %p167
      $region26: #{tpu_custom_call.1} parent=5 // pred_check_branch
        %170 = sbr.rel (%p168) target = $region28
      $region27: #{tpu_custom_call.1} parent=5 // pred_region
        // Predicated region
        $region29: #{tpu_custom_call.1} parent=27 // pred_check
          %p171 = pneg %p38
        $region30: #{tpu_custom_call.1} parent=27 // pred_check_branch
          %173 = sbr.rel (%p171) target = $region32
        $region31: #{tpu_custom_call.1} parent=27 // pred_region
          %s174 = sand.u32 %s28, 1
          %s175 = scalar_lea.sflag [#allocation4], %s174
          %s176 = sand.u32 %s28, 1
          %s177 = smul.addr %s176, 512
          %s178 = scalar_lea.vmem [#allocation3], %s177
          %s179 = smul.u32 16, %s18
          %s181 = ssub.s32 8192, 8192
          %182 = vsyncadd %s175, %s181
          %s183 = smul.addr %s179, 8
          %s184 = smul.addr %s183, 64
          %s185 = scalar_lea.hbm %s0, %s184
          %s186 = sshll.u32 %s178, 4
          %s187 = int_to_ptr.vmem [resolvable:$true] %s186
          %192 = dma.hbm_to_vmem [thread:$0]  %s185, 8192, %s187, %s175, 512, 512, 32
        $region32: #{tpu_custom_call.1} parent=27 // pred_fallthru
          _
      $region28: #{tpu_custom_call.1} parent=5 // pred_fallthru
        _
      %p193 = scmp.le.s32.totalorder 1, %s18
      %p194 = scmp.lt.s32.totalorder %s18, 3
      %p195 = pnand %p193, %p194
      %p196 = pneg %p195
      // Predicated region
      $region33: #{tpu_custom_call.1} parent=5 // pred_check
        _
      $region34: #{tpu_custom_call.1} parent=5 // pred_check_branch
        %198 = sbr.rel (%p195) target = $region36
      $region35: #{tpu_custom_call.1} parent=5 // pred_region
        %s199 = ssub.s32 %s18, 1
        %s200 = sand.u32 %s31, 1
        %s201 = scalar_lea.sflag [#allocation4], %s200
        %s202 = sand.u32 %s31, 1
        %s203 = smul.addr %s202, 512
        %s204 = scalar_lea.vmem [#allocation3], %s203
        // Predicated region
        $region37: #{tpu_custom_call.1} parent=35 // pred_check
          %p205 = pneg %p44
        $region38: #{tpu_custom_call.1} parent=35 // pred_check_branch
          %207 = sbr.rel (%p205) target = $region40
        $region39: #{tpu_custom_call.1} parent=35 // pred_region
          %208 = dma.done %s201, 8192
        $region40: #{tpu_custom_call.1} parent=35 // pred_fallthru
          _
        // Predicated region
        $region41: #{tpu_custom_call.1} parent=35 // pred_check
          %p209 = pneg %p65
        $region42: #{tpu_custom_call.1} parent=35 // pred_check_branch
          %211 = sbr.rel (%p209) target = $region44
        $region43: #{tpu_custom_call.1} parent=35 // pred_region
          %212 = dma.done [#allocation7], 8192
        $region44: #{tpu_custom_call.1} parent=35 // pred_fallthru
          _
        %s213 = sand.u32 %s31, 1
        %s214 = scalar_lea.sflag [#allocation4], %s213
        %s215 = sand.u32 %s31, 1
        %s216 = smul.addr %s215, 512
        %s217 = scalar_lea.vmem [#allocation3], %s216
        %p218 = pneg %p44
        %p219 = pneg %p41
        %p220 = pneg %p65
        %p221 = pneg %p62
        %p222 = pneg %p86
        %p223 = pneg %p83
        %p224 = pneg %p107
        %p225 = pneg %p104
        %p226 = pneg %p133
        %p227 = pneg %p130
        %s228 = sand.u32 %s120, 1
        %s229 = scalar_lea.sflag [#allocation5], %s228
        %s230 = sand.u32 %s120, 1
        %s231 = smul.addr %s230, 8
        %s232 = scalar_lea.vmem [#allocation8], %s231
        %s233 = smul.u32 16, %s23
        %v235 = vld [vmem:[%s204] sm:$0xff]
        %v236 = vld [vmem:[%s204 + $0x8] sm:$0xff]
        %v237 = vld [vmem:[%s204 + $0x10] sm:$0xff]
        %v238 = vld [vmem:[%s204 + $0x18] sm:$0xff]
        %v239 = vld [vmem:[%s204 + $0x20] sm:$0xff]
        %v240 = vld [vmem:[%s204 + $0x28] sm:$0xff]
        %v241 = vld [vmem:[%s204 + $0x30] sm:$0xff]
        %v242 = vld [vmem:[%s204 + $0x38] sm:$0xff]
        %v243 = vld [vmem:[%s204 + $0x40] sm:$0xff]
        %v244 = vld [vmem:[%s204 + $0x48] sm:$0xff]
        %v245 = vld [vmem:[%s204 + $0x50] sm:$0xff]
        %v246 = vld [vmem:[%s204 + $0x58] sm:$0xff]
        %v247 = vld [vmem:[%s204 + $0x60] sm:$0xff]
        %v248 = vld [vmem:[%s204 + $0x68] sm:$0xff]
        %v249 = vld [vmem:[%s204 + $0x70] sm:$0xff]
        %v250 = vld [vmem:[%s204 + $0x78] sm:$0xff]
        %v251 = vld [vmem:[%s204 + $0x80] sm:$0xff]
        %v252 = vld [vmem:[%s204 + $0x88] sm:$0xff]
        %v253 = vld [vmem:[%s204 + $0x90] sm:$0xff]
        %v254 = vld [vmem:[%s204 + $0x98] sm:$0xff]
        %v255 = vld [vmem:[%s204 + $0xa0] sm:$0xff]
        %v256 = vld [vmem:[%s204 + $0xa8] sm:$0xff]
        %v257 = vld [vmem:[%s204 + $0xb0] sm:$0xff]
        %v258 = vld [vmem:[%s204 + $0xb8] sm:$0xff]
        %v259 = vld [vmem:[%s204 + $0xc0] sm:$0xff]
        %v260 = vld [vmem:[%s204 + $0xc8] sm:$0xff]
        %v261 = vld [vmem:[%s204 + $0xd0] sm:$0xff]
        %v262 = vld [vmem:[%s204 + $0xd8] sm:$0xff]
        %v263 = vld [vmem:[%s204 + $0xe0] sm:$0xff]
        %v264 = vld [vmem:[%s204 + $0xe8] sm:$0xff]
        %v265 = vld [vmem:[%s204 + $0xf0] sm:$0xff]
        %v266 = vld [vmem:[%s204 + $0xf8] sm:$0xff]
        %v267 = vld [vmem:[%s204 + $0x100] sm:$0xff]
        %v268 = vld [vmem:[%s204 + $0x108] sm:$0xff]
        %v269 = vld [vmem:[%s204 + $0x110] sm:$0xff]
        %v270 = vld [vmem:[%s204 + $0x118] sm:$0xff]
        %v271 = vld [vmem:[%s204 + $0x120] sm:$0xff]
        %v272 = vld [vmem:[%s204 + $0x128] sm:$0xff]
        %v273 = vld [vmem:[%s204 + $0x130] sm:$0xff]
        %v274 = vld [vmem:[%s204 + $0x138] sm:$0xff]
        %v275 = vld [vmem:[%s204 + $0x140] sm:$0xff]
        %v276 = vld [vmem:[%s204 + $0x148] sm:$0xff]
        %v277 = vld [vmem:[%s204 + $0x150] sm:$0xff]
        %v278 = vld [vmem:[%s204 + $0x158] sm:$0xff]
        %v279 = vld [vmem:[%s204 + $0x160] sm:$0xff]
        %v280 = vld [vmem:[%s204 + $0x168] sm:$0xff]
        %v281 = vld [vmem:[%s204 + $0x170] sm:$0xff]
        %v282 = vld [vmem:[%s204 + $0x178] sm:$0xff]
        %v283 = vld [vmem:[%s204 + $0x180] sm:$0xff]
        %v284 = vld [vmem:[%s204 + $0x188] sm:$0xff]
        %v285 = vld [vmem:[%s204 + $0x190] sm:$0xff]
        %v286 = vld [vmem:[%s204 + $0x198] sm:$0xff]
        %v287 = vld [vmem:[%s204 + $0x1a0] sm:$0xff]
        %v288 = vld [vmem:[%s204 + $0x1a8] sm:$0xff]
        %v289 = vld [vmem:[%s204 + $0x1b0] sm:$0xff]
        %v290 = vld [vmem:[%s204 + $0x1b8] sm:$0xff]
        %v291 = vld [vmem:[%s204 + $0x1c0] sm:$0xff]
        %v292 = vld [vmem:[%s204 + $0x1c8] sm:$0xff]
        %v293 = vld [vmem:[%s204 + $0x1d0] sm:$0xff]
        %v294 = vld [vmem:[%s204 + $0x1d8] sm:$0xff]
        %v295 = vld [vmem:[%s204 + $0x1e0] sm:$0xff]
        %v296 = vld [vmem:[%s204 + $0x1e8] sm:$0xff]
        %v297 = vld [vmem:[%s204 + $0x1f0] sm:$0xff]
        %v298 = vld [vmem:[%s204 + $0x1f8] sm:$0xff]
        %v299 = vld [vmem:[#allocation6] sm:$0xf]
        %v300 = vld [vmem:[#allocation6 + $0x4] sm:$0xf]
        %v301 = vld [vmem:[#allocation6 + $0x8] sm:$0xf]
        %v302 = vld [vmem:[#allocation6 + $0xc] sm:$0xf]
        %v303 = vld [vmem:[#allocation6 + $0x10] sm:$0xf]
        %v304 = vld [vmem:[#allocation6 + $0x14] sm:$0xf]
        %v305 = vld [vmem:[#allocation6 + $0x18] sm:$0xf]
        %v306 = vld [vmem:[#allocation6 + $0x1c] sm:$0xf]
        %v307 = vld [vmem:[#allocation6 + $0x20] sm:$0xf]
        %v308 = vld [vmem:[#allocation6 + $0x24] sm:$0xf]
        %v309 = vld [vmem:[#allocation6 + $0x28] sm:$0xf]
        %v310 = vld [vmem:[#allocation6 + $0x2c] sm:$0xf]
        %v311 = vld [vmem:[#allocation6 + $0x30] sm:$0xf]
        %v312 = vld [vmem:[#allocation6 + $0x34] sm:$0xf]
        %v313 = vld [vmem:[#allocation6 + $0x38] sm:$0xf]
        %v314 = vld [vmem:[#allocation6 + $0x3c] sm:$0xf]
        %v315 = vld [vmem:[#allocation6 + $0x40] sm:$0xf]
        %v316 = vld [vmem:[#allocation6 + $0x44] sm:$0xf]
        %v317 = vld [vmem:[#allocation6 + $0x48] sm:$0xf]
        %v318 = vld [vmem:[#allocation6 + $0x4c] sm:$0xf]
        %v319 = vld [vmem:[#allocation6 + $0x50] sm:$0xf]
        %v320 = vld [vmem:[#allocation6 + $0x54] sm:$0xf]
        %v321 = vld [vmem:[#allocation6 + $0x58] sm:$0xf]
        %v322 = vld [vmem:[#allocation6 + $0x5c] sm:$0xf]
        %v323 = vld [vmem:[#allocation6 + $0x60] sm:$0xf]
        %v324 = vld [vmem:[#allocation6 + $0x64] sm:$0xf]
        %v325 = vld [vmem:[#allocation6 + $0x68] sm:$0xf]
        %v326 = vld [vmem:[#allocation6 + $0x6c] sm:$0xf]
        %v327 = vld [vmem:[#allocation6 + $0x70] sm:$0xf]
        %v328 = vld [vmem:[#allocation6 + $0x74] sm:$0xf]
        %v329 = vld [vmem:[#allocation6 + $0x78] sm:$0xf]
        %v330 = vld [vmem:[#allocation6 + $0x7c] sm:$0xf]
        %v331 = vld [vmem:[#allocation6 + $0x80] sm:$0xf]
        %v332 = vld [vmem:[#allocation6 + $0x84] sm:$0xf]
        %v333 = vld [vmem:[#allocation6 + $0x88] sm:$0xf]
        %v334 = vld [vmem:[#allocation6 + $0x8c] sm:$0xf]
        %v335 = vld [vmem:[#allocation6 + $0x90] sm:$0xf]
        %v336 = vld [vmem:[#allocation6 + $0x94] sm:$0xf]
        %v337 = vld [vmem:[#allocation6 + $0x98] sm:$0xf]
        %v338 = vld [vmem:[#allocation6 + $0x9c] sm:$0xf]
        %v339 = vld [vmem:[#allocation6 + $0xa0] sm:$0xf]
        %v340 = vld [vmem:[#allocation6 + $0xa4] sm:$0xf]
        %v341 = vld [vmem:[#allocation6 + $0xa8] sm:$0xf]
        %v342 = vld [vmem:[#allocation6 + $0xac] sm:$0xf]
        %v343 = vld [vmem:[#allocation6 + $0xb0] sm:$0xf]
        %v344 = vld [vmem:[#allocation6 + $0xb4] sm:$0xf]
        %v345 = vld [vmem:[#allocation6 + $0xb8] sm:$0xf]
        %v346 = vld [vmem:[#allocation6 + $0xbc] sm:$0xf]
        %v347 = vld [vmem:[#allocation6 + $0xc0] sm:$0xf]
        %v348 = vld [vmem:[#allocation6 + $0xc4] sm:$0xf]
        %v349 = vld [vmem:[#allocation6 + $0xc8] sm:$0xf]
        %v350 = vld [vmem:[#allocation6 + $0xcc] sm:$0xf]
        %v351 = vld [vmem:[#allocation6 + $0xd0] sm:$0xf]
        %v352 = vld [vmem:[#allocation6 + $0xd4] sm:$0xf]
        %v353 = vld [vmem:[#allocation6 + $0xd8] sm:$0xf]
        %v354 = vld [vmem:[#allocation6 + $0xdc] sm:$0xf]
        %v355 = vld [vmem:[#allocation6 + $0xe0] sm:$0xf]
        %v356 = vld [vmem:[#allocation6 + $0xe4] sm:$0xf]
        %v357 = vld [vmem:[#allocation6 + $0xe8] sm:$0xf]
        %v358 = vld [vmem:[#allocation6 + $0xec] sm:$0xf]
        %v359 = vld [vmem:[#allocation6 + $0xf0] sm:$0xf]
        %v360 = vld [vmem:[#allocation6 + $0xf4] sm:$0xf]
        %v361 = vld [vmem:[#allocation6 + $0xf8] sm:$0xf]
        %v362 = vld [vmem:[#allocation6 + $0xfc] sm:$0xf]
        %v363 = vld [vmem:[#allocation6 + $0x100] sm:$0xf]
        %v364 = vld [vmem:[#allocation6 + $0x104] sm:$0xf]
        %v365 = vld [vmem:[#allocation6 + $0x108] sm:$0xf]
        %v366 = vld [vmem:[#allocation6 + $0x10c] sm:$0xf]
        %v367 = vld [vmem:[#allocation6 + $0x110] sm:$0xf]
        %v368 = vld [vmem:[#allocation6 + $0x114] sm:$0xf]
        %v369 = vld [vmem:[#allocation6 + $0x118] sm:$0xf]
        %v370 = vld [vmem:[#allocation6 + $0x11c] sm:$0xf]
        %v371 = vld [vmem:[#allocation6 + $0x120] sm:$0xf]
        %v372 = vld [vmem:[#allocation6 + $0x124] sm:$0xf]
        %v373 = vld [vmem:[#allocation6 + $0x128] sm:$0xf]
        %v374 = vld [vmem:[#allocation6 + $0x12c] sm:$0xf]
        %v375 = vld [vmem:[#allocation6 + $0x130] sm:$0xf]
        %v376 = vld [vmem:[#allocation6 + $0x134] sm:$0xf]
        %v377 = vld [vmem:[#allocation6 + $0x138] sm:$0xf]
        %v378 = vld [vmem:[#allocation6 + $0x13c] sm:$0xf]
        %v379 = vld [vmem:[#allocation6 + $0x140] sm:$0xf]
        %v380 = vld [vmem:[#allocation6 + $0x144] sm:$0xf]
        %v381 = vld [vmem:[#allocation6 + $0x148] sm:$0xf]
        %v382 = vld [vmem:[#allocation6 + $0x14c] sm:$0xf]
        %v383 = vld [vmem:[#allocation6 + $0x150] sm:$0xf]
        %v384 = vld [vmem:[#allocation6 + $0x154] sm:$0xf]
        %v385 = vld [vmem:[#allocation6 + $0x158] sm:$0xf]
        %v386 = vld [vmem:[#allocation6 + $0x15c] sm:$0xf]
        %v387 = vld [vmem:[#allocation6 + $0x160] sm:$0xf]
        %v388 = vld [vmem:[#allocation6 + $0x164] sm:$0xf]
        %v389 = vld [vmem:[#allocation6 + $0x168] sm:$0xf]
        %v390 = vld [vmem:[#allocation6 + $0x16c] sm:$0xf]
        %v391 = vld [vmem:[#allocation6 + $0x170] sm:$0xf]
        %v392 = vld [vmem:[#allocation6 + $0x174] sm:$0xf]
        %v393 = vld [vmem:[#allocation6 + $0x178] sm:$0xf]
        %v394 = vld [vmem:[#allocation6 + $0x17c] sm:$0xf]
        %v395 = vld [vmem:[#allocation6 + $0x180] sm:$0xf]
        %v396 = vld [vmem:[#allocation6 + $0x184] sm:$0xf]
        %v397 = vld [vmem:[#allocation6 + $0x188] sm:$0xf]
        %v398 = vld [vmem:[#allocation6 + $0x18c] sm:$0xf]
        %v399 = vld [vmem:[#allocation6 + $0x190] sm:$0xf]
        %v400 = vld [vmem:[#allocation6 + $0x194] sm:$0xf]
        %v401 = vld [vmem:[#allocation6 + $0x198] sm:$0xf]
        %v402 = vld [vmem:[#allocation6 + $0x19c] sm:$0xf]
        %v403 = vld [vmem:[#allocation6 + $0x1a0] sm:$0xf]
        %v404 = vld [vmem:[#allocation6 + $0x1a4] sm:$0xf]
        %v405 = vld [vmem:[#allocation6 + $0x1a8] sm:$0xf]
        %v406 = vld [vmem:[#allocation6 + $0x1ac] sm:$0xf]
        %v407 = vld [vmem:[#allocation6 + $0x1b0] sm:$0xf]
        %v408 = vld [vmem:[#allocation6 + $0x1b4] sm:$0xf]
        %v409 = vld [vmem:[#allocation6 + $0x1b8] sm:$0xf]
        %v410 = vld [vmem:[#allocation6 + $0x1bc] sm:$0xf]
        %v411 = vld [vmem:[#allocation6 + $0x1c0] sm:$0xf]
        %v412 = vld [vmem:[#allocation6 + $0x1c4] sm:$0xf]
        %v413 = vld [vmem:[#allocation6 + $0x1c8] sm:$0xf]
        %v414 = vld [vmem:[#allocation6 + $0x1cc] sm:$0xf]
        %v415 = vld [vmem:[#allocation6 + $0x1d0] sm:$0xf]
        %v416 = vld [vmem:[#allocation6 + $0x1d4] sm:$0xf]
        %v417 = vld [vmem:[#allocation6 + $0x1d8] sm:$0xf]
        %v418 = vld [vmem:[#allocation6 + $0x1dc] sm:$0xf]
        %v419 = vld [vmem:[#allocation6 + $0x1e0] sm:$0xf]
        %v420 = vld [vmem:[#allocation6 + $0x1e4] sm:$0xf]
        %v421 = vld [vmem:[#allocation6 + $0x1e8] sm:$0xf]
        %v422 = vld [vmem:[#allocation6 + $0x1ec] sm:$0xf]
        %v423 = vld [vmem:[#allocation6 + $0x1f0] sm:$0xf]
        %v424 = vld [vmem:[#allocation6 + $0x1f4] sm:$0xf]
        %v425 = vld [vmem:[#allocation6 + $0x1f8] sm:$0xf]
        %v426 = vld [vmem:[#allocation6 + $0x1fc] sm:$0xf]
        %v427 = vld [vmem:[%s2] sm:$0x1]
        %v429 = vlaneseq
        %v430 = vshrl.u32 %v429, 7
        %v431 = vsub.s32 0, %v430
        %v432 = vrot.slane %v427, %v431
        %v498 = vunpack.c.l.b16 %v235
        %v499 = vunpack.c.h.b16 %v235
        %v500 = vunpack.c.l.b16 %v236
        %v501 = vunpack.c.h.b16 %v236
        %v502 = vunpack.c.l.b16 %v237
        %v503 = vunpack.c.h.b16 %v237
        %v504 = vunpack.c.l.b16 %v238
        %v505 = vunpack.c.h.b16 %v238
        %v506 = vunpack.c.l.b16 %v239
        %v507 = vunpack.c.h.b16 %v239
        %v508 = vunpack.c.l.b16 %v240
        %v509 = vunpack.c.h.b16 %v240
        %v510 = vunpack.c.l.b16 %v241
        %v511 = vunpack.c.h.b16 %v241
        %v512 = vunpack.c.l.b16 %v242
        %v513 = vunpack.c.h.b16 %v242
        %v514 = vunpack.c.l.b16 %v243
        %v515 = vunpack.c.h.b16 %v243
        %v516 = vunpack.c.l.b16 %v244
        %v517 = vunpack.c.h.b16 %v244
        %v518 = vunpack.c.l.b16 %v245
        %v519 = vunpack.c.h.b16 %v245
        %v520 = vunpack.c.l.b16 %v246
        %v521 = vunpack.c.h.b16 %v246
        %v522 = vunpack.c.l.b16 %v247
        %v523 = vunpack.c.h.b16 %v247
        %v524 = vunpack.c.l.b16 %v248
        %v525 = vunpack.c.h.b16 %v248
        %v526 = vunpack.c.l.b16 %v249
        %v527 = vunpack.c.h.b16 %v249
        %v528 = vunpack.c.l.b16 %v250
        %v529 = vunpack.c.h.b16 %v250
        %v530 = vunpack.c.l.b16 %v251
        %v531 = vunpack.c.h.b16 %v251
        %v532 = vunpack.c.l.b16 %v252
        %v533 = vunpack.c.h.b16 %v252
        %v534 = vunpack.c.l.b16 %v253
        %v535 = vunpack.c.h.b16 %v253
        %v536 = vunpack.c.l.b16 %v254
        %v537 = vunpack.c.h.b16 %v254
        %v538 = vunpack.c.l.b16 %v255
        %v539 = vunpack.c.h.b16 %v255
        %v540 = vunpack.c.l.b16 %v256
        %v541 = vunpack.c.h.b16 %v256
        %v542 = vunpack.c.l.b16 %v257
        %v543 = vunpack.c.h.b16 %v257
        %v544 = vunpack.c.l.b16 %v258
        %v545 = vunpack.c.h.b16 %v258
        %v546 = vunpack.c.l.b16 %v259
        %v547 = vunpack.c.h.b16 %v259
        %v548 = vunpack.c.l.b16 %v260
        %v549 = vunpack.c.h.b16 %v260
        %v550 = vunpack.c.l.b16 %v261
        %v551 = vunpack.c.h.b16 %v261
        %v552 = vunpack.c.l.b16 %v262
        %v553 = vunpack.c.h.b16 %v262
        %v554 = vunpack.c.l.b16 %v263
        %v555 = vunpack.c.h.b16 %v263
        %v556 = vunpack.c.l.b16 %v264
        %v557 = vunpack.c.h.b16 %v264
        %v558 = vunpack.c.l.b16 %v265
        %v559 = vunpack.c.h.b16 %v265
        %v560 = vunpack.c.l.b16 %v266
        %v561 = vunpack.c.h.b16 %v266
        %v562 = vunpack.c.l.b16 %v267
        %v563 = vunpack.c.h.b16 %v267
        %v564 = vunpack.c.l.b16 %v268
        %v565 = vunpack.c.h.b16 %v268
        %v566 = vunpack.c.l.b16 %v269
        %v567 = vunpack.c.h.b16 %v269
        %v568 = vunpack.c.l.b16 %v270
        %v569 = vunpack.c.h.b16 %v270
        %v570 = vunpack.c.l.b16 %v271
        %v571 = vunpack.c.h.b16 %v271
        %v572 = vunpack.c.l.b16 %v272
        %v573 = vunpack.c.h.b16 %v272
        %v574 = vunpack.c.l.b16 %v273
        %v575 = vunpack.c.h.b16 %v273
        %v576 = vunpack.c.l.b16 %v274
        %v577 = vunpack.c.h.b16 %v274
        %v578 = vunpack.c.l.b16 %v275
        %v579 = vunpack.c.h.b16 %v275
        %v580 = vunpack.c.l.b16 %v276
        %v581 = vunpack.c.h.b16 %v276
        %v582 = vunpack.c.l.b16 %v277
        %v583 = vunpack.c.h.b16 %v277
        %v584 = vunpack.c.l.b16 %v278
        %v585 = vunpack.c.h.b16 %v278
        %v586 = vunpack.c.l.b16 %v279
        %v587 = vunpack.c.h.b16 %v279
        %v588 = vunpack.c.l.b16 %v280
        %v589 = vunpack.c.h.b16 %v280
        %v590 = vunpack.c.l.b16 %v281
        %v591 = vunpack.c.h.b16 %v281
        %v592 = vunpack.c.l.b16 %v282
        %v593 = vunpack.c.h.b16 %v282
        %v594 = vunpack.c.l.b16 %v283
        %v595 = vunpack.c.h.b16 %v283
        %v596 = vunpack.c.l.b16 %v284
        %v597 = vunpack.c.h.b16 %v284
        %v598 = vunpack.c.l.b16 %v285
        %v599 = vunpack.c.h.b16 %v285
        %v600 = vunpack.c.l.b16 %v286
        %v601 = vunpack.c.h.b16 %v286
        %v602 = vunpack.c.l.b16 %v287
        %v603 = vunpack.c.h.b16 %v287
        %v604 = vunpack.c.l.b16 %v288
        %v605 = vunpack.c.h.b16 %v288
        %v606 = vunpack.c.l.b16 %v289
        %v607 = vunpack.c.h.b16 %v289
        %v608 = vunpack.c.l.b16 %v290
        %v609 = vunpack.c.h.b16 %v290
        %v610 = vunpack.c.l.b16 %v291
        %v611 = vunpack.c.h.b16 %v291
        %v612 = vunpack.c.l.b16 %v292
        %v613 = vunpack.c.h.b16 %v292
        %v614 = vunpack.c.l.b16 %v293
        %v615 = vunpack.c.h.b16 %v293
        %v616 = vunpack.c.l.b16 %v294
        %v617 = vunpack.c.h.b16 %v294
        %v618 = vunpack.c.l.b16 %v295
        %v619 = vunpack.c.h.b16 %v295
        %v620 = vunpack.c.l.b16 %v296
        %v621 = vunpack.c.h.b16 %v296
        %v622 = vunpack.c.l.b16 %v297
        %v623 = vunpack.c.h.b16 %v297
        %v624 = vunpack.c.l.b16 %v298
        %v625 = vunpack.c.h.b16 %v298
        %v626 = vpack.c.b16 %v506, %v498
        %v627 = vpack.c.b16 %v507, %v499
        %v628 = vpack.c.b16 %v508, %v500
        %v629 = vpack.c.b16 %v509, %v501
        %v630 = vpack.c.b16 %v510, %v502
        %v631 = vpack.c.b16 %v511, %v503
        %v632 = vpack.c.b16 %v512, %v504
        %v633 = vpack.c.b16 %v513, %v505
        %v634 = vpack.c.b16 %v522, %v514
        %v635 = vpack.c.b16 %v523, %v515
        %v636 = vpack.c.b16 %v524, %v516
        %v637 = vpack.c.b16 %v525, %v517
        %v638 = vpack.c.b16 %v526, %v518
        %v639 = vpack.c.b16 %v527, %v519
        %v640 = vpack.c.b16 %v528, %v520
        %v641 = vpack.c.b16 %v529, %v521
        %v642 = vpack.c.b16 %v538, %v530
        %v643 = vpack.c.b16 %v539, %v531
        %v644 = vpack.c.b16 %v540, %v532
        %v645 = vpack.c.b16 %v541, %v533
        %v646 = vpack.c.b16 %v542, %v534
        %v647 = vpack.c.b16 %v543, %v535
        %v648 = vpack.c.b16 %v544, %v536
        %v649 = vpack.c.b16 %v545, %v537
        %v650 = vpack.c.b16 %v554, %v546
        %v651 = vpack.c.b16 %v555, %v547
        %v652 = vpack.c.b16 %v556, %v548
        %v653 = vpack.c.b16 %v557, %v549
        %v654 = vpack.c.b16 %v558, %v550
        %v655 = vpack.c.b16 %v559, %v551
        %v656 = vpack.c.b16 %v560, %v552
        %v657 = vpack.c.b16 %v561, %v553
        %v658 = vpack.c.b16 %v570, %v562
        %v659 = vpack.c.b16 %v571, %v563
        %v660 = vpack.c.b16 %v572, %v564
        %v661 = vpack.c.b16 %v573, %v565
        %v662 = vpack.c.b16 %v574, %v566
        %v663 = vpack.c.b16 %v575, %v567
        %v664 = vpack.c.b16 %v576, %v568
        %v665 = vpack.c.b16 %v577, %v569
        %v666 = vpack.c.b16 %v586, %v578
        %v667 = vpack.c.b16 %v587, %v579
        %v668 = vpack.c.b16 %v588, %v580
        %v669 = vpack.c.b16 %v589, %v581
        %v670 = vpack.c.b16 %v590, %v582
        %v671 = vpack.c.b16 %v591, %v583
        %v672 = vpack.c.b16 %v592, %v584
        %v673 = vpack.c.b16 %v593, %v585
        %v674 = vpack.c.b16 %v602, %v594
        %v675 = vpack.c.b16 %v603, %v595
        %v676 = vpack.c.b16 %v604, %v596
        %v677 = vpack.c.b16 %v605, %v597
        %v678 = vpack.c.b16 %v606, %v598
        %v679 = vpack.c.b16 %v607, %v599
        %v680 = vpack.c.b16 %v608, %v600
        %v681 = vpack.c.b16 %v609, %v601
        %v682 = vpack.c.b16 %v618, %v610
        %v683 = vpack.c.b16 %v619, %v611
        %v684 = vpack.c.b16 %v620, %v612
        %v685 = vpack.c.b16 %v621, %v613
        %v686 = vpack.c.b16 %v622, %v614
        %v687 = vpack.c.b16 %v623, %v615
        %v688 = vpack.c.b16 %v624, %v616
        %v689 = vpack.c.b16 %v625, %v617
        %v882 = vunpack.c.l.b16 %v299
        %v883 = vunpack.c.l.b16 %v300
        %v884 = vunpack.c.l.b16 %v301
        %v885 = vunpack.c.l.b16 %v302
        %v886 = vunpack.c.l.b16 %v303
        %v887 = vunpack.c.l.b16 %v304
        %v888 = vunpack.c.l.b16 %v305
        %v889 = vunpack.c.l.b16 %v306
        %v890 = vunpack.c.l.b16 %v307
        %v891 = vunpack.c.l.b16 %v308
        %v892 = vunpack.c.l.b16 %v309
        %v893 = vunpack.c.l.b16 %v310
        %v894 = vunpack.c.l.b16 %v311
        %v895 = vunpack.c.l.b16 %v312
        %v896 = vunpack.c.l.b16 %v313
        %v897 = vunpack.c.l.b16 %v314
        %v898 = vunpack.c.l.b16 %v315
        %v899 = vunpack.c.l.b16 %v316
        %v900 = vunpack.c.l.b16 %v317
        %v901 = vunpack.c.l.b16 %v318
        %v902 = vunpack.c.l.b16 %v319
        %v903 = vunpack.c.l.b16 %v320
        %v904 = vunpack.c.l.b16 %v321
        %v905 = vunpack.c.l.b16 %v322
        %v906 = vunpack.c.l.b16 %v323
        %v907 = vunpack.c.l.b16 %v324
        %v908 = vunpack.c.l.b16 %v325
        %v909 = vunpack.c.l.b16 %v326
        %v910 = vunpack.c.l.b16 %v327
        %v911 = vunpack.c.l.b16 %v328
        %v912 = vunpack.c.l.b16 %v329
        %v913 = vunpack.c.l.b16 %v330
        %v914 = vunpack.c.l.b16 %v331
        %v915 = vunpack.c.l.b16 %v332
        %v916 = vunpack.c.l.b16 %v333
        %v917 = vunpack.c.l.b16 %v334
        %v918 = vunpack.c.l.b16 %v335
        %v919 = vunpack.c.l.b16 %v336
        %v920 = vunpack.c.l.b16 %v337
        %v921 = vunpack.c.l.b16 %v338
        %v922 = vunpack.c.l.b16 %v339
        %v923 = vunpack.c.l.b16 %v340
        %v924 = vunpack.c.l.b16 %v341
        %v925 = vunpack.c.l.b16 %v342
        %v926 = vunpack.c.l.b16 %v343
        %v927 = vunpack.c.l.b16 %v344
        %v928 = vunpack.c.l.b16 %v345
        %v929 = vunpack.c.l.b16 %v346
        %v930 = vunpack.c.l.b16 %v347
        %v931 = vunpack.c.l.b16 %v348
        %v932 = vunpack.c.l.b16 %v349
        %v933 = vunpack.c.l.b16 %v350
        %v934 = vunpack.c.l.b16 %v351
        %v935 = vunpack.c.l.b16 %v352
        %v936 = vunpack.c.l.b16 %v353
        %v937 = vunpack.c.l.b16 %v354
        %v938 = vunpack.c.l.b16 %v355
        %v939 = vunpack.c.l.b16 %v356
        %v940 = vunpack.c.l.b16 %v357
        %v941 = vunpack.c.l.b16 %v358
        %v942 = vunpack.c.l.b16 %v359
        %v943 = vunpack.c.l.b16 %v360
        %v944 = vunpack.c.l.b16 %v361
        %v945 = vunpack.c.l.b16 %v362
        %v946 = vunpack.c.l.b16 %v363
        %v947 = vunpack.c.l.b16 %v364
        %v948 = vunpack.c.l.b16 %v365
        %v949 = vunpack.c.l.b16 %v366
        %v950 = vunpack.c.l.b16 %v367
        %v951 = vunpack.c.l.b16 %v368
        %v952 = vunpack.c.l.b16 %v369
        %v953 = vunpack.c.l.b16 %v370
        %v954 = vunpack.c.l.b16 %v371
        %v955 = vunpack.c.l.b16 %v372
        %v956 = vunpack.c.l.b16 %v373
        %v957 = vunpack.c.l.b16 %v374
        %v958 = vunpack.c.l.b16 %v375
        %v959 = vunpack.c.l.b16 %v376
        %v960 = vunpack.c.l.b16 %v377
        %v961 = vunpack.c.l.b16 %v378
        %v962 = vunpack.c.l.b16 %v379
        %v963 = vunpack.c.l.b16 %v380
        %v964 = vunpack.c.l.b16 %v381
        %v965 = vunpack.c.l.b16 %v382
        %v966 = vunpack.c.l.b16 %v383
        %v967 = vunpack.c.l.b16 %v384
        %v968 = vunpack.c.l.b16 %v385
        %v969 = vunpack.c.l.b16 %v386
        %v970 = vunpack.c.l.b16 %v387
        %v971 = vunpack.c.l.b16 %v388
        %v972 = vunpack.c.l.b16 %v389
        %v973 = vunpack.c.l.b16 %v390
        %v974 = vunpack.c.l.b16 %v391
        %v975 = vunpack.c.l.b16 %v392
        %v976 = vunpack.c.l.b16 %v393
        %v977 = vunpack.c.l.b16 %v394
        %v978 = vunpack.c.l.b16 %v395
        %v979 = vunpack.c.l.b16 %v396
        %v980 = vunpack.c.l.b16 %v397
        %v981 = vunpack.c.l.b16 %v398
        %v982 = vunpack.c.l.b16 %v399
        %v983 = vunpack.c.l.b16 %v400
        %v984 = vunpack.c.l.b16 %v401
        %v985 = vunpack.c.l.b16 %v402
        %v986 = vunpack.c.l.b16 %v403
        %v987 = vunpack.c.l.b16 %v404
        %v988 = vunpack.c.l.b16 %v405
        %v989 = vunpack.c.l.b16 %v406
        %v990 = vunpack.c.l.b16 %v407
        %v991 = vunpack.c.l.b16 %v408
        %v992 = vunpack.c.l.b16 %v409
        %v993 = vunpack.c.l.b16 %v410
        %v994 = vunpack.c.l.b16 %v411
        %v995 = vunpack.c.l.b16 %v412
        %v996 = vunpack.c.l.b16 %v413
        %v997 = vunpack.c.l.b16 %v414
        %v998 = vunpack.c.l.b16 %v415
        %v999 = vunpack.c.l.b16 %v416
        %v1000 = vunpack.c.l.b16 %v417
        %v1001 = vunpack.c.l.b16 %v418
        %v1002 = vunpack.c.l.b16 %v419
        %v1003 = vunpack.c.l.b16 %v420
        %v1004 = vunpack.c.l.b16 %v421
        %v1005 = vunpack.c.l.b16 %v422
        %v1006 = vunpack.c.l.b16 %v423
        %v1007 = vunpack.c.l.b16 %v424
        %v1008 = vunpack.c.l.b16 %v425
        %v1009 = vunpack.c.l.b16 %v426
        %v1010 = vpack.c.b16 %v883, %v882
        %v1011 = vpack.c.b16 %v885, %v884
        %v1012 = vpack.c.b16 %v887, %v886
        %v1013 = vpack.c.b16 %v889, %v888
        %v1014 = vpack.c.b16 %v891, %v890
        %v1015 = vpack.c.b16 %v893, %v892
        %v1016 = vpack.c.b16 %v895, %v894
        %v1017 = vpack.c.b16 %v897, %v896
        %v1018 = vpack.c.b16 %v899, %v898
        %v1019 = vpack.c.b16 %v901, %v900
        %v1020 = vpack.c.b16 %v903, %v902
        %v1021 = vpack.c.b16 %v905, %v904
        %v1022 = vpack.c.b16 %v907, %v906
        %v1023 = vpack.c.b16 %v909, %v908
        %v1024 = vpack.c.b16 %v911, %v910
        %v1025 = vpack.c.b16 %v913, %v912
        %v1026 = vpack.c.b16 %v915, %v914
        %v1027 = vpack.c.b16 %v917, %v916
        %v1028 = vpack.c.b16 %v919, %v918
        %v1029 = vpack.c.b16 %v921, %v920
        %v1030 = vpack.c.b16 %v923, %v922
        %v1031 = vpack.c.b16 %v925, %v924
        %v1032 = vpack.c.b16 %v927, %v926
        %v1033 = vpack.c.b16 %v929, %v928
        %v1034 = vpack.c.b16 %v931, %v930
        %v1035 = vpack.c.b16 %v933, %v932
        %v1036 = vpack.c.b16 %v935, %v934
        %v1037 = vpack.c.b16 %v937, %v936
        %v1038 = vpack.c.b16 %v939, %v938
        %v1039 = vpack.c.b16 %v941, %v940
        %v1040 = vpack.c.b16 %v943, %v942
        %v1041 = vpack.c.b16 %v945, %v944
        %v1042 = vpack.c.b16 %v947, %v946
        %v1043 = vpack.c.b16 %v949, %v948
        %v1044 = vpack.c.b16 %v951, %v950
        %v1045 = vpack.c.b16 %v953, %v952
        %v1046 = vpack.c.b16 %v955, %v954
        %v1047 = vpack.c.b16 %v957, %v956
        %v1048 = vpack.c.b16 %v959, %v958
        %v1049 = vpack.c.b16 %v961, %v960
        %v1050 = vpack.c.b16 %v963, %v962
        %v1051 = vpack.c.b16 %v965, %v964
        %v1052 = vpack.c.b16 %v967, %v966
        %v1053 = vpack.c.b16 %v969, %v968
        %v1054 = vpack.c.b16 %v971, %v970
        %v1055 = vpack.c.b16 %v973, %v972
        %v1056 = vpack.c.b16 %v975, %v974
        %v1057 = vpack.c.b16 %v977, %v976
        %v1058 = vpack.c.b16 %v979, %v978
        %v1059 = vpack.c.b16 %v981, %v980
        %v1060 = vpack.c.b16 %v983, %v982
        %v1061 = vpack.c.b16 %v985, %v984
        %v1062 = vpack.c.b16 %v987, %v986
        %v1063 = vpack.c.b16 %v989, %v988
        %v1064 = vpack.c.b16 %v991, %v990
        %v1065 = vpack.c.b16 %v993, %v992
        %v1066 = vpack.c.b16 %v995, %v994
        %v1067 = vpack.c.b16 %v997, %v996
        %v1068 = vpack.c.b16 %v999, %v998
        %v1069 = vpack.c.b16 %v1001, %v1000
        %v1070 = vpack.c.b16 %v1003, %v1002
        %v1071 = vpack.c.b16 %v1005, %v1004
        %v1072 = vpack.c.b16 %v1007, %v1006
        %v1073 = vpack.c.b16 %v1009, %v1008
        %1138 = vmatprep.subr.bf16.mxu0 0
        %1139 = vmatpush1.bf16.msra.mxu0 %v1017
        %1140 = vmatprep.subr.bf16.mxu0 0
        %1141 = vmatpush1.bf16.msra.mxu0 %v1016
        %1142 = vmatprep.subr.bf16.mxu0 0
        %1143 = vmatpush1.bf16.msra.mxu0 %v1015
        %1144 = vmatprep.subr.bf16.mxu0 0
        %1145 = vmatpush1.bf16.msra.mxu0 %v1014
        %1146 = vmatprep.subr.bf16.mxu0 0
        %1147 = vmatpush1.bf16.msra.mxu0 %v1013
        %1148 = vmatprep.subr.bf16.mxu0 0
        %1149 = vmatpush1.bf16.msra.mxu0 %v1012
        %1150 = vmatprep.subr.bf16.mxu0 0
        %1151 = vmatpush1.bf16.msra.mxu0 %v1011
        %1152 = vmatprep.subr.bf16.mxu0 0
        %1153 = vmatpush1.bf16.msra.mxu0 %v1010
        %1154 = vmatprep.subr.bf16.mxu0 0
        %1155 = vmatpush2.bf16.msra.mxu0 %v1025
        %1156 = vmatprep.subr.bf16.mxu0 0
        %1157 = vmatpush2.bf16.msra.mxu0 %v1024
        %1158 = vmatprep.subr.bf16.mxu0 0
        %1159 = vmatpush2.bf16.msra.mxu0 %v1023
        %1160 = vmatprep.subr.bf16.mxu0 0
        %1161 = vmatpush2.bf16.msra.mxu0 %v1022
        %1162 = vmatprep.subr.bf16.mxu0 0
        %1163 = vmatpush2.bf16.msra.mxu0 %v1021
        %1164 = vmatprep.subr.bf16.mxu0 0
        %1165 = vmatpush2.bf16.msra.mxu0 %v1020
        %1166 = vmatprep.subr.bf16.mxu0 0
        %1167 = vmatpush2.bf16.msra.mxu0 %v1019
        %1168 = vmatprep.subr.bf16.mxu0 0
        %1169 = vmatpush2.bf16.msra.mxu0 %v1018
        %1170 = vmatprep.mubr.bf16.mxu0 %v627
        %1171 = vmatmul.mubr.bf16.gmra.mxu0 %v626
        %v1172 = vpop.f32.mrf.mxu0
        %v1173 = vadd.f32 %v432, %v1172
        %v1174 = vpop.f32.mrf.mxu0
        %v1175 = vpop.f32.mrf.mxu0
        %v1176 = vadd.f32 %v432, %v1175
        %v1177 = vpop.f32.mrf.mxu0
        %1178 = vmatprep.mubr.bf16.mxu0 %v635
        %1179 = vmatmul.mubr.bf16.gmra.mxu0 %v634
        %v1180 = vpop.f32.mrf.mxu0
        %v1181 = vadd.f32 %v432, %v1180
        %v1182 = vpop.f32.mrf.mxu0
        %v1183 = vpop.f32.mrf.mxu0
        %v1184 = vadd.f32 %v432, %v1183
        %v1185 = vpop.f32.mrf.mxu0
        %1186 = vmatprep.mubr.bf16.mxu0 %v643
        %1187 = vmatmul.mubr.bf16.gmra.mxu0 %v642
        %v1188 = vpop.f32.mrf.mxu0
        %v1189 = vadd.f32 %v432, %v1188
        %v1190 = vpop.f32.mrf.mxu0
        %v1191 = vpop.f32.mrf.mxu0
        %v1192 = vadd.f32 %v432, %v1191
        %v1193 = vpop.f32.mrf.mxu0
        %1194 = vmatprep.mubr.bf16.mxu0 %v651
        %1195 = vmatmul.mubr.bf16.gmra.mxu0 %v650
        %v1196 = vpop.f32.mrf.mxu0
        %v1197 = vadd.f32 %v432, %v1196
        %v1198 = vpop.f32.mrf.mxu0
        %v1199 = vpop.f32.mrf.mxu0
        %v1200 = vadd.f32 %v432, %v1199
        %v1201 = vpop.f32.mrf.mxu0
        %1202 = vmatprep.mubr.bf16.mxu0 %v659
        %1203 = vmatmul.mubr.bf16.gmra.mxu0 %v658
        %v1204 = vpop.f32.mrf.mxu0
        %v1205 = vadd.f32 %v432, %v1204
        %v1206 = vpop.f32.mrf.mxu0
        %v1207 = vpop.f32.mrf.mxu0
        %v1208 = vadd.f32 %v432, %v1207
        %v1209 = vpop.f32.mrf.mxu0
        %1210 = vmatprep.mubr.bf16.mxu0 %v667
        %1211 = vmatmul.mubr.bf16.gmra.mxu0 %v666
        %v1212 = vpop.f32.mrf.mxu0
        %v1213 = vadd.f32 %v432, %v1212
        %v1214 = vpop.f32.mrf.mxu0
        %v1215 = vpop.f32.mrf.mxu0
        %v1216 = vadd.f32 %v432, %v1215
        %v1217 = vpop.f32.mrf.mxu0
        %1218 = vmatprep.mubr.bf16.mxu0 %v675
        %1219 = vmatmul.mubr.bf16.gmra.mxu0 %v674
        %v1220 = vpop.f32.mrf.mxu0
        %v1221 = vadd.f32 %v432, %v1220
        %v1222 = vpop.f32.mrf.mxu0
        %v1223 = vpop.f32.mrf.mxu0
        %v1224 = vadd.f32 %v432, %v1223
        %v1225 = vpop.f32.mrf.mxu0
        %1226 = vmatprep.mubr.bf16.mxu0 %v683
        %1227 = vmatmul.mubr.bf16.gmra.mxu0 %v682
        %v1228 = vpop.f32.mrf.mxu0
        %v1229 = vadd.f32 %v432, %v1228
        %v1230 = vpop.f32.mrf.mxu0
        %v1231 = vpop.f32.mrf.mxu0
        %v1232 = vadd.f32 %v432, %v1231
        %v1233 = vpop.f32.mrf.mxu0
        %1234 = vdwg.mxu0
        %1235 = vmatprep.subr.bf16.mxu0 0
        %1236 = vmatpush1.bf16.msra.mxu0 %v1033
        %1237 = vmatprep.subr.bf16.mxu0 0
        %1238 = vmatpush1.bf16.msra.mxu0 %v1032
        %1239 = vmatprep.subr.bf16.mxu0 0
        %1240 = vmatpush1.bf16.msra.mxu0 %v1031
        %1241 = vmatprep.subr.bf16.mxu0 0
        %1242 = vmatpush1.bf16.msra.mxu0 %v1030
        %1243 = vmatprep.subr.bf16.mxu0 0
        %1244 = vmatpush1.bf16.msra.mxu0 %v1029
        %1245 = vmatprep.subr.bf16.mxu0 0
        %1246 = vmatpush1.bf16.msra.mxu0 %v1028
        %1247 = vmatprep.subr.bf16.mxu0 0
        %1248 = vmatpush1.bf16.msra.mxu0 %v1027
        %1249 = vmatprep.subr.bf16.mxu0 0
        %1250 = vmatpush1.bf16.msra.mxu0 %v1026
        %1251 = vmatprep.subr.bf16.mxu0 0
        %1252 = vmatpush2.bf16.msra.mxu0 %v1041
        %1253 = vmatprep.subr.bf16.mxu0 0
        %1254 = vmatpush2.bf16.msra.mxu0 %v1040
        %1255 = vmatprep.subr.bf16.mxu0 0
        %1256 = vmatpush2.bf16.msra.mxu0 %v1039
        %1257 = vmatprep.subr.bf16.mxu0 0
        %1258 = vmatpush2.bf16.msra.mxu0 %v1038
        %1259 = vmatprep.subr.bf16.mxu0 0
        %1260 = vmatpush2.bf16.msra.mxu0 %v1037
        %1261 = vmatprep.subr.bf16.mxu0 0
        %1262 = vmatpush2.bf16.msra.mxu0 %v1036
        %1263 = vmatprep.subr.bf16.mxu0 0
        %1264 = vmatpush2.bf16.msra.mxu0 %v1035
        %1265 = vmatprep.subr.bf16.mxu0 0
        %1266 = vmatpush2.bf16.msra.mxu0 %v1034
        %1267 = vmatprep.mubr.bf16.mxu0 %v629
        %1268 = vmatmul.mubr.bf16.gmra.mxu0 %v628
        %v1269 = vpop.f32.mrf.mxu0
        %v1270 = vadd.f32 %v1173, %v1269
        %v1271 = vpop.f32.mrf.mxu0
        %v1272 = vpop.f32.mrf.mxu0
        %v1273 = vadd.f32 %v1176, %v1272
        %v1274 = vpop.f32.mrf.mxu0
        %1275 = vmatprep.mubr.bf16.mxu0 %v637
        %1276 = vmatmul.mubr.bf16.gmra.mxu0 %v636
        %v1277 = vpop.f32.mrf.mxu0
        %v1278 = vadd.f32 %v1181, %v1277
        %v1279 = vpop.f32.mrf.mxu0
        %v1280 = vpop.f32.mrf.mxu0
        %v1281 = vadd.f32 %v1184, %v1280
        %v1282 = vpop.f32.mrf.mxu0
        %1283 = vmatprep.mubr.bf16.mxu0 %v645
        %1284 = vmatmul.mubr.bf16.gmra.mxu0 %v644
        %v1285 = vpop.f32.mrf.mxu0
        %v1286 = vadd.f32 %v1189, %v1285
        %v1287 = vpop.f32.mrf.mxu0
        %v1288 = vpop.f32.mrf.mxu0
        %v1289 = vadd.f32 %v1192, %v1288
        %v1290 = vpop.f32.mrf.mxu0
        %1291 = vmatprep.mubr.bf16.mxu0 %v653
        %1292 = vmatmul.mubr.bf16.gmra.mxu0 %v652
        %v1293 = vpop.f32.mrf.mxu0
        %v1294 = vadd.f32 %v1197, %v1293
        %v1295 = vpop.f32.mrf.mxu0
        %v1296 = vpop.f32.mrf.mxu0
        %v1297 = vadd.f32 %v1200, %v1296
        %v1298 = vpop.f32.mrf.mxu0
        %1299 = vmatprep.mubr.bf16.mxu0 %v661
        %1300 = vmatmul.mubr.bf16.gmra.mxu0 %v660
        %v1301 = vpop.f32.mrf.mxu0
        %v1302 = vadd.f32 %v1205, %v1301
        %v1303 = vpop.f32.mrf.mxu0
        %v1304 = vpop.f32.mrf.mxu0
        %v1305 = vadd.f32 %v1208, %v1304
        %v1306 = vpop.f32.mrf.mxu0
        %1307 = vmatprep.mubr.bf16.mxu0 %v669
        %1308 = vmatmul.mubr.bf16.gmra.mxu0 %v668
        %v1309 = vpop.f32.mrf.mxu0
        %v1310 = vadd.f32 %v1213, %v1309
        %v1311 = vpop.f32.mrf.mxu0
        %v1312 = vpop.f32.mrf.mxu0
        %v1313 = vadd.f32 %v1216, %v1312
        %v1314 = vpop.f32.mrf.mxu0
        %1315 = vmatprep.mubr.bf16.mxu0 %v677
        %1316 = vmatmul.mubr.bf16.gmra.mxu0 %v676
        %v1317 = vpop.f32.mrf.mxu0
        %v1318 = vadd.f32 %v1221, %v1317
        %v1319 = vpop.f32.mrf.mxu0
        %v1320 = vpop.f32.mrf.mxu0
        %v1321 = vadd.f32 %v1224, %v1320
        %v1322 = vpop.f32.mrf.mxu0
        %1323 = vmatprep.mubr.bf16.mxu0 %v685
        %1324 = vmatmul.mubr.bf16.gmra.mxu0 %v684
        %v1325 = vpop.f32.mrf.mxu0
        %v1326 = vadd.f32 %v1229, %v1325
        %v1327 = vpop.f32.mrf.mxu0
        %v1328 = vpop.f32.mrf.mxu0
        %v1329 = vadd.f32 %v1232, %v1328
        %v1330 = vpop.f32.mrf.mxu0
        %1331 = vdwg.mxu0
        %1332 = vmatprep.subr.bf16.mxu0 0
        %1333 = vmatpush1.bf16.msra.mxu0 %v1049
        %1334 = vmatprep.subr.bf16.mxu0 0
        %1335 = vmatpush1.bf16.msra.mxu0 %v1048
        %1336 = vmatprep.subr.bf16.mxu0 0
        %1337 = vmatpush1.bf16.msra.mxu0 %v1047
        %1338 = vmatprep.subr.bf16.mxu0 0
        %1339 = vmatpush1.bf16.msra.mxu0 %v1046
        %1340 = vmatprep.subr.bf16.mxu0 0
        %1341 = vmatpush1.bf16.msra.mxu0 %v1045
        %1342 = vmatprep.subr.bf16.mxu0 0
        %1343 = vmatpush1.bf16.msra.mxu0 %v1044
        %1344 = vmatprep.subr.bf16.mxu0 0
        %1345 = vmatpush1.bf16.msra.mxu0 %v1043
        %1346 = vmatprep.subr.bf16.mxu0 0
        %1347 = vmatpush1.bf16.msra.mxu0 %v1042
        %1348 = vmatprep.subr.bf16.mxu0 0
        %1349 = vmatpush2.bf16.msra.mxu0 %v1057
        %1350 = vmatprep.subr.bf16.mxu0 0
        %1351 = vmatpush2.bf16.msra.mxu0 %v1056
        %1352 = vmatprep.subr.bf16.mxu0 0
        %1353 = vmatpush2.bf16.msra.mxu0 %v1055
        %1354 = vmatprep.subr.bf16.mxu0 0
        %1355 = vmatpush2.bf16.msra.mxu0 %v1054
        %1356 = vmatprep.subr.bf16.mxu0 0
        %1357 = vmatpush2.bf16.msra.mxu0 %v1053
        %1358 = vmatprep.subr.bf16.mxu0 0
        %1359 = vmatpush2.bf16.msra.mxu0 %v1052
        %1360 = vmatprep.subr.bf16.mxu0 0
        %1361 = vmatpush2.bf16.msra.mxu0 %v1051
        %1362 = vmatprep.subr.bf16.mxu0 0
        %1363 = vmatpush2.bf16.msra.mxu0 %v1050
        %1364 = vmatprep.mubr.bf16.mxu0 %v631
        %1365 = vmatmul.mubr.bf16.gmra.mxu0 %v630
        %v1366 = vpop.f32.mrf.mxu0
        %v1367 = vadd.f32 %v1270, %v1366
        %v1368 = vpop.f32.mrf.mxu0
        %v1369 = vpop.f32.mrf.mxu0
        %v1370 = vadd.f32 %v1273, %v1369
        %v1371 = vpop.f32.mrf.mxu0
        %1372 = vmatprep.mubr.bf16.mxu0 %v639
        %1373 = vmatmul.mubr.bf16.gmra.mxu0 %v638
        %v1374 = vpop.f32.mrf.mxu0
        %v1375 = vadd.f32 %v1278, %v1374
        %v1376 = vpop.f32.mrf.mxu0
        %v1377 = vpop.f32.mrf.mxu0
        %v1378 = vadd.f32 %v1281, %v1377
        %v1379 = vpop.f32.mrf.mxu0
        %1380 = vmatprep.mubr.bf16.mxu0 %v647
        %1381 = vmatmul.mubr.bf16.gmra.mxu0 %v646
        %v1382 = vpop.f32.mrf.mxu0
        %v1383 = vadd.f32 %v1286, %v1382
        %v1384 = vpop.f32.mrf.mxu0
        %v1385 = vpop.f32.mrf.mxu0
        %v1386 = vadd.f32 %v1289, %v1385
        %v1387 = vpop.f32.mrf.mxu0
        %1388 = vmatprep.mubr.bf16.mxu0 %v655
        %1389 = vmatmul.mubr.bf16.gmra.mxu0 %v654
        %v1390 = vpop.f32.mrf.mxu0
        %v1391 = vadd.f32 %v1294, %v1390
        %v1392 = vpop.f32.mrf.mxu0
        %v1393 = vpop.f32.mrf.mxu0
        %v1394 = vadd.f32 %v1297, %v1393
        %v1395 = vpop.f32.mrf.mxu0
        %1396 = vmatprep.mubr.bf16.mxu0 %v663
        %1397 = vmatmul.mubr.bf16.gmra.mxu0 %v662
        %v1398 = vpop.f32.mrf.mxu0
        %v1399 = vadd.f32 %v1302, %v1398
        %v1400 = vpop.f32.mrf.mxu0
        %v1401 = vpop.f32.mrf.mxu0
        %v1402 = vadd.f32 %v1305, %v1401
        %v1403 = vpop.f32.mrf.mxu0
        %1404 = vmatprep.mubr.bf16.mxu0 %v671
        %1405 = vmatmul.mubr.bf16.gmra.mxu0 %v670
        %v1406 = vpop.f32.mrf.mxu0
        %v1407 = vadd.f32 %v1310, %v1406
        %v1408 = vpop.f32.mrf.mxu0
        %v1409 = vpop.f32.mrf.mxu0
        %v1410 = vadd.f32 %v1313, %v1409
        %v1411 = vpop.f32.mrf.mxu0
        %1412 = vmatprep.mubr.bf16.mxu0 %v679
        %1413 = vmatmul.mubr.bf16.gmra.mxu0 %v678
        %v1414 = vpop.f32.mrf.mxu0
        %v1415 = vadd.f32 %v1318, %v1414
        %v1416 = vpop.f32.mrf.mxu0
        %v1417 = vpop.f32.mrf.mxu0
        %v1418 = vadd.f32 %v1321, %v1417
        %v1419 = vpop.f32.mrf.mxu0
        %1420 = vmatprep.mubr.bf16.mxu0 %v687
        %1421 = vmatmul.mubr.bf16.gmra.mxu0 %v686
        %v1422 = vpop.f32.mrf.mxu0
        %v1423 = vadd.f32 %v1326, %v1422
        %v1424 = vpop.f32.mrf.mxu0
        %v1425 = vpop.f32.mrf.mxu0
        %v1426 = vadd.f32 %v1329, %v1425
        %v1427 = vpop.f32.mrf.mxu0
        %1428 = vdwg.mxu0
        %1429 = vmatprep.subr.bf16.mxu0 0
        %1430 = vmatpush1.bf16.msra.mxu0 %v1065
        %1431 = vmatprep.subr.bf16.mxu0 0
        %1432 = vmatpush1.bf16.msra.mxu0 %v1064
        %1433 = vmatprep.subr.bf16.mxu0 0
        %1434 = vmatpush1.bf16.msra.mxu0 %v1063
        %1435 = vmatprep.subr.bf16.mxu0 0
        %1436 = vmatpush1.bf16.msra.mxu0 %v1062
        %1437 = vmatprep.subr.bf16.mxu0 0
        %1438 = vmatpush1.bf16.msra.mxu0 %v1061
        %1439 = vmatprep.subr.bf16.mxu0 0
        %1440 = vmatpush1.bf16.msra.mxu0 %v1060
        %1441 = vmatprep.subr.bf16.mxu0 0
        %1442 = vmatpush1.bf16.msra.mxu0 %v1059
        %1443 = vmatprep.subr.bf16.mxu0 0
        %1444 = vmatpush1.bf16.msra.mxu0 %v1058
        %1445 = vmatprep.subr.bf16.mxu0 0
        %1446 = vmatpush2.bf16.msra.mxu0 %v1073
        %1447 = vmatprep.subr.bf16.mxu0 0
        %1448 = vmatpush2.bf16.msra.mxu0 %v1072
        %1449 = vmatprep.subr.bf16.mxu0 0
        %1450 = vmatpush2.bf16.msra.mxu0 %v1071
        %1451 = vmatprep.subr.bf16.mxu0 0
        %1452 = vmatpush2.bf16.msra.mxu0 %v1070
        %1453 = vmatprep.subr.bf16.mxu0 0
        %1454 = vmatpush2.bf16.msra.mxu0 %v1069
        %1455 = vmatprep.subr.bf16.mxu0 0
        %1456 = vmatpush2.bf16.msra.mxu0 %v1068
        %1457 = vmatprep.subr.bf16.mxu0 0
        %1458 = vmatpush2.bf16.msra.mxu0 %v1067
        %1459 = vmatprep.subr.bf16.mxu0 0
        %1460 = vmatpush2.bf16.msra.mxu0 %v1066
        %1461 = vmatprep.mubr.bf16.mxu0 %v633
        %1462 = vmatmul.mubr.bf16.gmra.mxu0 %v632
        %v1463 = vpop.f32.mrf.mxu0
        %v1464 = vadd.f32 %v1367, %v1463
        %v1465 = vpop.f32.mrf.mxu0
        %v1466 = vpop.f32.mrf.mxu0
        %v1467 = vadd.f32 %v1370, %v1466
        %v1468 = vpop.f32.mrf.mxu0
        %1469 = vmatprep.mubr.bf16.mxu0 %v641
        %1470 = vmatmul.mubr.bf16.gmra.mxu0 %v640
        %v1471 = vpop.f32.mrf.mxu0
        %v1472 = vadd.f32 %v1375, %v1471
        %v1473 = vpop.f32.mrf.mxu0
        %v1474 = vpop.f32.mrf.mxu0
        %v1475 = vadd.f32 %v1378, %v1474
        %v1476 = vpop.f32.mrf.mxu0
        %1477 = vmatprep.mubr.bf16.mxu0 %v649
        %1478 = vmatmul.mubr.bf16.gmra.mxu0 %v648
        %v1479 = vpop.f32.mrf.mxu0
        %v1480 = vadd.f32 %v1383, %v1479
        %v1481 = vpop.f32.mrf.mxu0
        %v1482 = vpop.f32.mrf.mxu0
        %v1483 = vadd.f32 %v1386, %v1482
        %v1484 = vpop.f32.mrf.mxu0
        %1485 = vmatprep.mubr.bf16.mxu0 %v657
        %1486 = vmatmul.mubr.bf16.gmra.mxu0 %v656
        %v1487 = vpop.f32.mrf.mxu0
        %v1488 = vadd.f32 %v1391, %v1487
        %v1489 = vpop.f32.mrf.mxu0
        %v1490 = vpop.f32.mrf.mxu0
        %v1491 = vadd.f32 %v1394, %v1490
        %v1492 = vpop.f32.mrf.mxu0
        %1493 = vmatprep.mubr.bf16.mxu0 %v665
        %1494 = vmatmul.mubr.bf16.gmra.mxu0 %v664
        %v1495 = vpop.f32.mrf.mxu0
        %v1496 = vadd.f32 %v1399, %v1495
        %v1497 = vpop.f32.mrf.mxu0
        %v1498 = vpop.f32.mrf.mxu0
        %v1499 = vadd.f32 %v1402, %v1498
        %v1500 = vpop.f32.mrf.mxu0
        %1501 = vmatprep.mubr.bf16.mxu0 %v673
        %1502 = vmatmul.mubr.bf16.gmra.mxu0 %v672
        %v1503 = vpop.f32.mrf.mxu0
        %v1504 = vadd.f32 %v1407, %v1503
        %v1505 = vpop.f32.mrf.mxu0
        %v1506 = vpop.f32.mrf.mxu0
        %v1507 = vadd.f32 %v1410, %v1506
        %v1508 = vpop.f32.mrf.mxu0
        %1509 = vmatprep.mubr.bf16.mxu0 %v681
        %1510 = vmatmul.mubr.bf16.gmra.mxu0 %v680
        %v1511 = vpop.f32.mrf.mxu0
        %v1512 = vadd.f32 %v1415, %v1511
        %v1513 = vpop.f32.mrf.mxu0
        %v1514 = vpop.f32.mrf.mxu0
        %v1515 = vadd.f32 %v1418, %v1514
        %v1516 = vpop.f32.mrf.mxu0
        %1517 = vmatprep.mubr.bf16.mxu0 %v689
        %1518 = vmatmul.mubr.bf16.gmra.mxu0 %v688
        %v1519 = vpop.f32.mrf.mxu0
        %v1520 = vadd.f32 %v1423, %v1519
        %v1521 = vpop.f32.mrf.mxu0
        %v1522 = vpop.f32.mrf.mxu0
        %v1523 = vadd.f32 %v1426, %v1522
        %v1524 = vpop.f32.mrf.mxu0
        %1525 = vdwg.mxu0
        %1526 = vxpose.xlu0.b32.start [1/16] %v1464, 128
        %1527 = vxpose.xlu0.b32.cont [2/16] %v1467, 128
        %1528 = vxpose.xlu0.b32.cont [3/16] %v1472, 128
        %1529 = vxpose.xlu0.b32.cont [4/16] %v1475, 128
        %1530 = vxpose.xlu0.b32.cont [5/16] %v1480, 128
        %1531 = vxpose.xlu0.b32.cont [6/16] %v1483, 128
        %1532 = vxpose.xlu0.b32.cont [7/16] %v1488, 128
        %1533 = vxpose.xlu0.b32.cont [8/16] %v1491, 128
        %1534 = vxpose.xlu0.b32.cont [9/16] %v1496, 128
        %1535 = vxpose.xlu0.b32.cont [10/16] %v1499, 128
        %1536 = vxpose.xlu0.b32.cont [11/16] %v1504, 128
        %1537 = vxpose.xlu0.b32.cont [12/16] %v1507, 128
        %1538 = vxpose.xlu0.b32.cont [13/16] %v1512, 128
        %1539 = vxpose.xlu0.b32.cont [14/16] %v1515, 128
        %1540 = vxpose.xlu0.b32.cont [15/16] %v1520, 128
        %1541 = vxpose.xlu0.b32.end [16/16] %v1523, 128
        %v1542 = vpop.trf.xlu0
        %v1543 = vpop.trf.xlu0
        %v1544 = vpop.trf.xlu0
        %v1545 = vpop.trf.xlu0
        %v1546 = vpop.trf.xlu0
        %v1547 = vpop.trf.xlu0
        %v1548 = vpop.trf.xlu0
        %v1549 = vpop.trf.xlu0
        %v1550 = vpop.trf.xlu0
        %v1551 = vpop.trf.xlu0
        %v1552 = vpop.trf.xlu0
        %v1553 = vpop.trf.xlu0
        %v1554 = vpop.trf.xlu0
        %v1555 = vpop.trf.xlu0
        %v1556 = vpop.trf.xlu0
        %v1557 = vpop.trf.xlu0
        %v1558 = vlaneseq
        %v1559 = vshrl.u32 %v1558, 7
        %v1560 = vadd.s32 %v1559, 8
        %v1561 = vadd.s32 %v1559, 16
        %v1562 = vadd.s32 %v1559, 24
        %v1563 = vadd.s32 %v1559, 32
        %v1564 = vadd.s32 %v1559, 40
        %v1565 = vadd.s32 %v1559, 48
        %v1566 = vadd.s32 %v1559, 56
        %v1567 = vadd.s32 %v1559, 64
        %v1568 = vadd.s32 %v1559, 72
        %v1569 = vadd.s32 %v1559, 80
        %v1570 = vadd.s32 %v1559, 88
        %v1571 = vadd.s32 %v1559, 96
        %v1572 = vadd.s32 %v1559, 104
        %v1573 = vadd.s32 %v1559, 112
        %v1574 = vadd.s32 %v1559, 120
        %vm1575 = vcmp.lt.s32.totalorder %v1559, 10
        %vm1576 = vcmp.lt.s32.totalorder %v1560, 10
        %vm1577 = vcmp.lt.s32.totalorder %v1561, 10
        %vm1578 = vcmp.lt.s32.totalorder %v1562, 10
        %vm1579 = vcmp.lt.s32.totalorder %v1563, 10
        %vm1580 = vcmp.lt.s32.totalorder %v1564, 10
        %vm1581 = vcmp.lt.s32.totalorder %v1565, 10
        %vm1582 = vcmp.lt.s32.totalorder %v1566, 10
        %vm1583 = vcmp.lt.s32.totalorder %v1567, 10
        %vm1584 = vcmp.lt.s32.totalorder %v1568, 10
        %vm1585 = vcmp.lt.s32.totalorder %v1569, 10
        %vm1586 = vcmp.lt.s32.totalorder %v1570, 10
        %vm1587 = vcmp.lt.s32.totalorder %v1571, 10
        %vm1588 = vcmp.lt.s32.totalorder %v1572, 10
        %vm1589 = vcmp.lt.s32.totalorder %v1573, 10
        %vm1590 = vcmp.lt.s32.totalorder %v1574, 10
        %v1591 = vsel %vm1575, %v1542, -1e+30
        %v1592 = vsel %vm1576, %v1543, -1e+30
        %v1593 = vsel %vm1577, %v1544, -1e+30
        %v1594 = vsel %vm1578, %v1545, -1e+30
        %v1595 = vsel %vm1579, %v1546, -1e+30
        %v1596 = vsel %vm1580, %v1547, -1e+30
        %v1597 = vsel %vm1581, %v1548, -1e+30
        %v1598 = vsel %vm1582, %v1549, -1e+30
        %v1599 = vsel %vm1583, %v1550, -1e+30
        %v1600 = vsel %vm1584, %v1551, -1e+30
        %v1601 = vsel %vm1585, %v1552, -1e+30
        %v1602 = vsel %vm1586, %v1553, -1e+30
        %v1603 = vsel %vm1587, %v1554, -1e+30
        %v1604 = vsel %vm1588, %v1555, -1e+30
        %v1605 = vsel %vm1589, %v1556, -1e+30
        %v1606 = vsel %vm1590, %v1557, -1e+30
        %v1607 = vmax.f32 %v1591, %v1595
        %v1608 = vmax.f32 %v1592, %v1596
        %v1609 = vmax.f32 %v1593, %v1597
        %v1610 = vmax.f32 %v1594, %v1598
        %v1611 = vmax.f32 %v1607, %v1599
        %v1612 = vmax.f32 %v1608, %v1600
        %v1613 = vmax.f32 %v1609, %v1601
        %v1614 = vmax.f32 %v1610, %v1602
        %v1615 = vmax.f32 %v1611, %v1603
        %v1616 = vmax.f32 %v1612, %v1604
        %v1617 = vmax.f32 %v1613, %v1605
        %v1618 = vmax.f32 %v1614, %v1606
        %v1619 = vmax.f32 %v1615, %v1616
        %v1620 = vmax.f32 %v1617, %v1618
        %v1621 = vmax.f32 %v1619, %v1620
        %v1622 = vrot.slane %v1621, 4
        %v1623 = vmax.f32 %v1621, %v1622
        %v1624 = vrot.slane %v1623, 2
        %v1625 = vmax.f32 %v1623, %v1624
        %v1626 = vrot.slane %v1625, 1
        %v1627 = vmax.f32 %v1625, %v1626
        %v1628 = vsub.f32 %v1591, %v1627
        %v1629 = vsub.f32 %v1592, %v1627
        %v1630 = vsub.f32 %v1593, %v1627
        %v1631 = vsub.f32 %v1594, %v1627
        %v1632 = vsub.f32 %v1595, %v1627
        %v1633 = vsub.f32 %v1596, %v1627
        %v1634 = vsub.f32 %v1597, %v1627
        %v1635 = vsub.f32 %v1598, %v1627
        %v1636 = vsub.f32 %v1599, %v1627
        %v1637 = vsub.f32 %v1600, %v1627
        %v1638 = vsub.f32 %v1601, %v1627
        %v1639 = vsub.f32 %v1602, %v1627
        %v1640 = vsub.f32 %v1603, %v1627
        %v1641 = vsub.f32 %v1604, %v1627
        %v1642 = vsub.f32 %v1605, %v1627
        %v1643 = vsub.f32 %v1606, %v1627
        %v1644 = vmul.f32 %v1628, 1.442695
        %v1645 = vpow.pop %v1644
        %v1646 = vmul.f32 %v1629, 1.442695
        %v1647 = vpow.pop %v1646
        %v1648 = vmul.f32 %v1630, 1.442695
        %v1649 = vpow.pop %v1648
        %v1650 = vmul.f32 %v1631, 1.442695
        %v1651 = vpow.pop %v1650
        %v1652 = vmul.f32 %v1632, 1.442695
        %v1653 = vpow.pop %v1652
        %v1654 = vmul.f32 %v1633, 1.442695
        %v1655 = vpow.pop %v1654
        %v1656 = vmul.f32 %v1634, 1.442695
        %v1657 = vpow.pop %v1656
        %v1658 = vmul.f32 %v1635, 1.442695
        %v1659 = vpow.pop %v1658
        %v1660 = vmul.f32 %v1636, 1.442695
        %v1661 = vpow.pop %v1660
        %v1662 = vmul.f32 %v1637, 1.442695
        %v1663 = vpow.pop %v1662
        %v1664 = vmul.f32 %v1638, 1.442695
        %v1665 = vpow.pop %v1664
        %v1666 = vmul.f32 %v1639, 1.442695
        %v1667 = vpow.pop %v1666
        %v1668 = vmul.f32 %v1640, 1.442695
        %v1669 = vpow.pop %v1668
        %v1670 = vmul.f32 %v1641, 1.442695
        %v1671 = vpow.pop %v1670
        %v1672 = vmul.f32 %v1642, 1.442695
        %v1673 = vpow.pop %v1672
        %v1674 = vmul.f32 %v1643, 1.442695
        %v1675 = vpow.pop %v1674
        %v1676 = vadd.f32 %v1645, %v1647
        %v1677 = vadd.f32 %v1676, %v1649
        %v1678 = vadd.f32 %v1677, %v1651
        %v1679 = vadd.f32 %v1678, %v1653
        %v1680 = vadd.f32 %v1679, %v1655
        %v1681 = vadd.f32 %v1680, %v1657
        %v1682 = vadd.f32 %v1681, %v1659
        %v1683 = vadd.f32 %v1682, %v1661
        %v1684 = vadd.f32 %v1683, %v1663
        %v1685 = vadd.f32 %v1684, %v1665
        %v1686 = vadd.f32 %v1685, %v1667
        %v1687 = vadd.f32 %v1686, %v1669
        %v1688 = vadd.f32 %v1687, %v1671
        %v1689 = vadd.f32 %v1688, %v1673
        %v1690 = vadd.f32 %v1689, %v1675
        %v1691 = vrot.slane %v1690, 4
        %v1692 = vadd.f32 %v1690, %v1691
        %v1693 = vrot.slane %v1692, 2
        %v1694 = vadd.f32 %v1692, %v1693
        %v1695 = vrot.slane %v1694, 1
        %v1696 = vadd.f32 %v1694, %v1695
        %v1697 = vlog2.pop %v1696
        %v1698 = vmul.f32 %v1697, 0.6931472
        %v1699 = vadd.f32 %v1627, %v1698
        %vm1700 = vcmp.ge.f32.partialorder %v1591, %v1627
        %vm1701 = vcmp.ge.f32.partialorder %v1592, %v1627
        %vm1702 = vcmp.ge.f32.partialorder %v1593, %v1627
        %vm1703 = vcmp.ge.f32.partialorder %v1594, %v1627
        %vm1704 = vcmp.ge.f32.partialorder %v1595, %v1627
        %vm1705 = vcmp.ge.f32.partialorder %v1596, %v1627
        %vm1706 = vcmp.ge.f32.partialorder %v1597, %v1627
        %vm1707 = vcmp.ge.f32.partialorder %v1598, %v1627
        %vm1708 = vcmp.ge.f32.partialorder %v1599, %v1627
        %vm1709 = vcmp.ge.f32.partialorder %v1600, %v1627
        %vm1710 = vcmp.ge.f32.partialorder %v1601, %v1627
        %vm1711 = vcmp.ge.f32.partialorder %v1602, %v1627
        %vm1712 = vcmp.ge.f32.partialorder %v1603, %v1627
        %vm1713 = vcmp.ge.f32.partialorder %v1604, %v1627
        %vm1714 = vcmp.ge.f32.partialorder %v1605, %v1627
        %vm1715 = vcmp.ge.f32.partialorder %v1606, %v1627
        %v1716 = vsel %vm1700, %v1559, 128
        %v1717 = vsel %vm1701, %v1560, 128
        %v1718 = vsel %vm1702, %v1561, 128
        %v1719 = vsel %vm1703, %v1562, 128
        %v1720 = vsel %vm1704, %v1563, 128
        %v1721 = vsel %vm1705, %v1564, 128
        %v1722 = vsel %vm1706, %v1565, 128
        %v1723 = vsel %vm1707, %v1566, 128
        %v1724 = vsel %vm1708, %v1567, 128
        %v1725 = vsel %vm1709, %v1568, 128
        %v1726 = vsel %vm1710, %v1569, 128
        %v1727 = vsel %vm1711, %v1570, 128
        %v1728 = vsel %vm1712, %v1571, 128
        %v1729 = vsel %vm1713, %v1572, 128
        %v1730 = vsel %vm1714, %v1573, 128
        %v1731 = vsel %vm1715, %v1574, 128
        %vm1732 = vcmp.lt.s32.totalorder %v1716, %v1720
        %v1733 = vsel %vm1732, %v1716, %v1720
        %vm1734 = vcmp.lt.s32.totalorder %v1717, %v1721
        %v1735 = vsel %vm1734, %v1717, %v1721
        %vm1736 = vcmp.lt.s32.totalorder %v1718, %v1722
        %v1737 = vsel %vm1736, %v1718, %v1722
        %vm1738 = vcmp.lt.s32.totalorder %v1719, %v1723
        %v1739 = vsel %vm1738, %v1719, %v1723
        %vm1740 = vcmp.lt.s32.totalorder %v1733, %v1724
        %v1741 = vsel %vm1740, %v1733, %v1724
        %vm1742 = vcmp.lt.s32.totalorder %v1735, %v1725
        %v1743 = vsel %vm1742, %v1735, %v1725
        %vm1744 = vcmp.lt.s32.totalorder %v1737, %v1726
        %v1745 = vsel %vm1744, %v1737, %v1726
        %vm1746 = vcmp.lt.s32.totalorder %v1739, %v1727
        %v1747 = vsel %vm1746, %v1739, %v1727
        %vm1748 = vcmp.lt.s32.totalorder %v1741, %v1728
        %v1749 = vsel %vm1748, %v1741, %v1728
        %vm1750 = vcmp.lt.s32.totalorder %v1743, %v1729
        %v1751 = vsel %vm1750, %v1743, %v1729
        %vm1752 = vcmp.lt.s32.totalorder %v1745, %v1730
        %v1753 = vsel %vm1752, %v1745, %v1730
        %vm1754 = vcmp.lt.s32.totalorder %v1747, %v1731
        %v1755 = vsel %vm1754, %v1747, %v1731
        %vm1756 = vcmp.lt.s32.totalorder %v1749, %v1751
        %v1757 = vsel %vm1756, %v1749, %v1751
        %vm1758 = vcmp.lt.s32.totalorder %v1753, %v1755
        %v1759 = vsel %vm1758, %v1753, %v1755
        %vm1760 = vcmp.lt.s32.totalorder %v1757, %v1759
        %v1761 = vsel %vm1760, %v1757, %v1759
        %v1762 = vrot.slane %v1761, 4
        %vm1763 = vcmp.lt.s32.totalorder %v1761, %v1762
        %v1764 = vsel %vm1763, %v1761, %v1762
        %v1765 = vrot.slane %v1764, 2
        %vm1766 = vcmp.lt.s32.totalorder %v1764, %v1765
        %v1767 = vsel %vm1766, %v1764, %v1765
        %v1768 = vrot.slane %v1767, 1
        %vm1769 = vcmp.lt.s32.totalorder %v1767, %v1768
        %v1770 = vsel %vm1769, %v1767, %v1768
        %v1772 = vrot.slane %v1543, 1
        %v1774 = vsub.f32 %v1543, %v1772
        %v1775 = vmax.f32 %v1774, 0.0
        %v1776 = vand.u32 2147483647, %v1774
        %v1777 = vsub.f32 0.0, %v1776
        %v1778 = vmul.f32 %v1777, 1.442695
        %v1779 = vpow.pop %v1778
        %v1780 = vadd.f32 %v1779, 1.0
        %v1781 = vlog2.pop %v1780
        %v1782 = vmul.f32 %v1781, 0.6931472
        %v1783 = vadd.f32 %v1775, %v1782
        %v1784 = vsub.f32 0.0, %v1783
        %v1785 = vsub.f32 0.0, %v1699
        %v1786 = vadd.f32 %v1785, %v1784
        %s1787 = sld [smem:[#allocation2]]
        %v1788 = vstv %s1787
        %vm1789 = vcmp.gt.f32.partialorder %v1786, %v1788
        %v1790 = vsel %vm1789, 10, %v1770
        %v1791 = vlaneseq
        %v1792 = vshrl.u32 %v1791, 7
        %v1793 = vsub.s32 2, %v1792
        %v1794 = vrot.slane %v1790, %v1793
        %1795 = vst [vmem:[%s232] sm:$0xff] %v1794
        %s1796 = sand.u32 %s120, 1
        %s1797 = scalar_lea.sflag [#allocation5], %s1796
        %s1798 = sand.u32 %s120, 1
        %s1799 = smul.addr %s1798, 8
        %s1800 = scalar_lea.vmem [#allocation8], %s1799
        // Predicated region
        $region45: #{tpu_custom_call.1} parent=35 // pred_check
          %p1801 = pneg %p130
        $region46: #{tpu_custom_call.1} parent=35 // pred_check_branch
          %1803 = sbr.rel (%p1801) target = $region48
        $region47: #{tpu_custom_call.1} parent=35 // pred_region
          %s1805 = ssub.s32 128, 128
          %1806 = vsyncadd %s1797, %s1805
          %s1807 = smul.addr %s23, 128
          %s1808 = scalar_lea.hbm %s4, %s1807
          %s1810 = sshll.u32 %s1800, 4
          %s1811 = int_to_ptr.vmem [resolvable:$true] %s1810
          %1813 = dma.vmem_to_hbm [thread:$0]  %s1811, 128, %s1808, %s1797
        $region48: #{tpu_custom_call.1} parent=35 // pred_fallthru
          _
      $region36: #{tpu_custom_call.1} parent=5 // pred_fallthru
        _
      %p1814 = scmp.le.s32.totalorder 2, %s18
      // Predicated region
      $region49: #{tpu_custom_call.1} parent=5 // pred_check
        %p1815 = pneg %p1814
      $region50: #{tpu_custom_call.1} parent=5 // pred_check_branch
        %1817 = sbr.rel (%p1815) target = $region52
      $region51: #{tpu_custom_call.1} parent=5 // pred_region
        %s1818 = ssub.s32 %s18, 2
        // Predicated region
        $region53: #{tpu_custom_call.1} parent=51 // pred_check
          %p1819 = pneg %p136
        $region54: #{tpu_custom_call.1} parent=51 // pred_check_branch
          %1821 = sbr.rel (%p1819) target = $region56
        $region55: #{tpu_custom_call.1} parent=51 // pred_region
          %s1822 = sand.u32 %s121, 1
          %s1823 = scalar_lea.sflag [#allocation5], %s1822
          %s1824 = sand.u32 %s121, 1
          %s1825 = smul.addr %s1824, 8
          %s1826 = scalar_lea.vmem [#allocation8], %s1825
          %1827 = dma.done %s1823, 128
        $region56: #{tpu_custom_call.1} parent=51 // pred_fallthru
          _
      $region52: #{tpu_custom_call.1} parent=5 // pred_fallthru
        _
    $region6: #{tpu_custom_call.1} parent=1 // loop_footer
      %s22 = sadd.s32 1, %s18
    $region7: #{tpu_custom_call.1} parent=1 // loop_footer_branch
      %17 = sbr.rel target = $region3
    $region8: #{tpu_custom_call.1} parent=1 // loop_exit
      _
    %1828 = vsyncpa [#allocation4], 1
    %s1829 = scalar_lea.sflag [#allocation4], 1
    %1830 = vsyncpa %s1829, 1
    %1831 = vsyncpa [#allocation7], 1
    %1832 = vsyncpa [#allocation5], 1
    %s1833 = scalar_lea.sflag [#allocation5], 1
    %1834 = vsyncpa %s1833, 1

</llo_original>
